<compile_context>
chip_gen: v7x
topology: tpu7x:2x2x1
jax: 0.10.0
libtpu: 0.0.40
codegen_flags: <defaults>
</compile_context>

<pallas_src>
import jax
import jax.numpy as jnp
from jax.experimental import pallas as pl
from jax.experimental.pallas import tpu as pltpu

EPS = 1e-5
LANES = 128  # lane-pad channel dim to this (real ResNet stages pad 64 -> 128 only)


# --------------------------------------------------------------------------- #
# Conv pass: 3x3 same-conv (+bias) on a row tile, one-pass BN stats epilogue.  #
# Optionally applies (BN affine + ReLU) of the *previous* layer to the input   #
# slab (so bn1+relu is fused into conv2's prologue).                           #
# --------------------------------------------------------------------------- #
def _make_conv_kernel(apply_input_bnrelu, th, w_out, cp, h_total):
    hp = h_total + 2          # padded image height
    wp = w_out + 2            # padded image width
    m = th * w_out            # rows of the im2col patch matrix

    def kernel(x_hbm, w_ref, b_ref, sc_ref, sh_ref,      # inputs
               y_ref, sum_ref, ssq_ref,                  # outputs
               xslab, patches, sem):                     # scratch
        n = pl.program_id(0)
        t = pl.program_id(1)
        nt = pl.num_programs(1)
        slot = t % 2

        # Padded images are stored flat along rows: image n = rows [n*hp, (n+1)*hp).
        def slab_copy(tt, sl):
            row0 = n * hp + tt * th
            return pltpu.make_async_copy(
                x_hbm.at[pl.ds(row0, th + 2)], xslab.at[sl], sem.at[sl])

        # Prime the double buffer at the first row-tile of each image.
        @pl.when(t == 0)
        def _():
            slab_copy(t, slot).start()

        slab_copy(t, slot).wait()

        # Prefetch the next halo slab while computing this one.
        @pl.when(t + 1 < nt)
        def _():
            slab_copy(t + 1, 1 - slot).start()

        xs = xslab[slot].astype(jnp.float32)              # (th+2, wp, cp)

        if apply_input_bnrelu:
            # Fused bn(prev layer) + relu on the halo slab (global stats, so
            # applying it per-tile is exact), then re-zero the spatial padding
            # ring so the BN shift does not leak into the conv halo.
            xs = jnp.maximum(xs * sc_ref[...] + sh_ref[...], 0.0)
            hg = t * th + jax.lax.broadcasted_iota(jnp.int32, xs.shape, 0)
            wg = jax.lax.broadcasted_iota(jnp.int32, xs.shape, 1)
            interior = (hg > 0) & (hg < hp - 1) & (wg > 0) & (wg < wp - 1)
            xs = jnp.where(interior, xs, 0.0)

        xs = xs.astype(patches.dtype)

        # im2col into a VMEM scratch: one lane-aligned 128-wide column block per
        # conv tap -> a single wide-K matmul instead of 9 tiny K=Cin matmuls.
        for ky in range(3):
            for kx in range(3):
                j = ky * 3 + kx
                patches[:, j * cp:(j + 1) * cp] = (
                    xs[ky:ky + th, kx:kx + w_out, :].reshape(m, cp))

        # (m, 9*cp) @ (9*cp, cp) on the MXU, f32 accumulation.
        y = jnp.dot(patches[...], w_ref[...], preferred_element_type=jnp.float32)
        y = y + b_ref[...]

        y_ref[...] = y.reshape(th, w_out, cp)

        # One-pass BN statistics (sum / sum-of-squares), accumulated across the
        # 'arbitrary' row-tile axis; finalized (mean/var) in the wrapper.
        @pl.when(t == 0)
        def _():
            sum_ref[...] = jnp.zeros_like(sum_ref)
            ssq_ref[...] = jnp.zeros_like(ssq_ref)

        part = y.reshape(m // 8, 8, cp)
        sum_ref[...] += jnp.sum(part, axis=0)
        ssq_ref[...] += jnp.sum(part * part, axis=0)

    return kernel


def _make_conv_call(n, h, w, cp, th, compute_dtype, apply_input_bnrelu):
    kernel = _make_conv_kernel(apply_input_bnrelu, th, w, cp, h)
    small = pl.BlockSpec((1, cp), lambda i, t: (0, 0))
    return pl.pallas_call(
        kernel,
        grid=(n, h // th),
        in_specs=[
            pl.BlockSpec(memory_space=pl.ANY),                    # padded input rows
            pl.BlockSpec((9 * cp, cp), lambda i, t: (0, 0)),      # weights (resident)
            small, small, small,                                  # bias, bn scale/shift
        ],
        out_specs=[
            pl.BlockSpec((None, th, w, cp), lambda i, t: (i, t, 0, 0)),   # conv out
            pl.BlockSpec((None, 8, cp), lambda i, t: (i, 0, 0)),          # sum acc
            pl.BlockSpec((None, 8, cp), lambda i, t: (i, 0, 0)),          # sumsq acc
        ],
        out_shape=[
            jax.ShapeDtypeStruct((n, h, w, cp), jnp.float32),
            jax.ShapeDtypeStruct((n, 8, cp), jnp.float32),
            jax.ShapeDtypeStruct((n, 8, cp), jnp.float32),
        ],
        scratch_shapes=[
            pltpu.VMEM((2, th + 2, w + 2, cp), compute_dtype),    # halo slab (dbl-buf)
            pltpu.VMEM((th * w, 9 * cp), compute_dtype),          # im2col patches
            pltpu.SemaphoreType.DMA((2,)),
        ],
        compiler_params=pltpu.CompilerParams(
            dimension_semantics=("parallel", "arbitrary"),
            vmem_limit_bytes=32 * 1024 * 1024),
    )


# --------------------------------------------------------------------------- #
# Final elementwise pass: bn2 affine + residual add + ReLU (lane-dense).       #
# --------------------------------------------------------------------------- #
def _bn_residual_relu_kernel(y_ref, x_ref, sc_ref, sh_ref, o_ref):
    y = y_ref[...] * sc_ref[...] + sh_ref[...]
    o_ref[...] = jnp.maximum(y + x_ref[...], 0.0)


def _make_bn_residual_call(n, h, w, cp, th):
    blk = pl.BlockSpec((None, th, w, cp), lambda i, t: (i, t, 0, 0))
    small = pl.BlockSpec((1, cp), lambda i, t: (0, 0))
    return pl.pallas_call(
        _bn_residual_relu_kernel,
        grid=(n, h // th),
        in_specs=[blk, blk, small, small],
        out_specs=blk,
        out_shape=jax.ShapeDtypeStruct((n, h, w, cp), jnp.float32),
        compiler_params=pltpu.CompilerParams(
            dimension_semantics=("parallel", "parallel"),
            vmem_limit_bytes=32 * 1024 * 1024),
    )


# --------------------------------------------------------------------------- #
# Wrapper                                                                      #
# --------------------------------------------------------------------------- #
def _finalize_bn(sum_out, ssq_out, gamma, beta, count):
    s = jnp.sum(sum_out, axis=(0, 1))
    ss = jnp.sum(ssq_out, axis=(0, 1))
    mean = s / count
    var = jnp.maximum(ss / count - mean * mean, 0.0)   # biased (training-mode) var
    scale = gamma * jax.lax.rsqrt(var + EPS)
    shift = beta - mean * scale
    return scale.reshape(1, -1), shift.reshape(1, -1)


def resnet_block(x_nchw, params, *, tile_h=8, compute_dtype=jnp.float32):
    """Forward of Block(in_channels=C, out_channels=C, stride=1). NCHW in/out."""
    N, Cin, H, W = x_nchw.shape
    Cout = params["w1"].shape[0]
    assert Cin == Cout, "identity_downsample=None requires Cin == Cout"
    CP = LANES
    assert Cout <= CP
    # TODO(synk): tile the channel dim as well for ResNet stages with C > 128.

    TH = min(tile_h, H)
    while H % TH:
        TH -= 1
    assert (TH * W) % 8 == 0

    # Layout plumbing (wrapper side): NCHW -> NHWC, lane-pad channels, spatial pad.
    x_nhwc = jnp.transpose(x_nchw, (0, 2, 3, 1)).astype(jnp.float32)
    x_c = jnp.pad(x_nhwc, ((0, 0), (0, 0), (0, 0), (0, CP - Cin)))   # identity input
    xp = jnp.pad(x_c, ((0, 0), (1, 1), (1, 1), (0, 0)))
    xp_flat = xp.reshape(N * (H + 2), W + 2, CP).astype(compute_dtype)

    def prep_w(w):  # torch (Cout, Cin, 3, 3) -> (9*CP, CP), K ordered (ky, kx, cin)
        w = jnp.transpose(w, (2, 3, 1, 0)).astype(jnp.float32)
        w = jnp.pad(w, ((0, 0), (0, 0), (0, CP - w.shape[2]), (0, CP - w.shape[3])))
        return w.reshape(9 * CP, CP).astype(compute_dtype)

    def pad_vec(v):
        return jnp.pad(v.astype(jnp.float32), (0, CP - v.shape[0]))

    w1, w2 = prep_w(params["w1"]), prep_w(params["w2"])
    b1 = pad_vec(params["b1"]).reshape(1, CP)
    b2 = pad_vec(params["b2"]).reshape(1, CP)
    g1, be1 = pad_vec(params["g1"]), pad_vec(params["be1"])
    g2, be2 = pad_vec(params["g2"]), pad_vec(params["be2"])

    ones = jnp.ones((1, CP), jnp.float32)
    zeros = jnp.zeros((1, CP), jnp.float32)

    conv1_call = _make_conv_call(N, H, W, CP, TH, compute_dtype, False)
    conv2_call = _make_conv_call(N, H, W, CP, TH, compute_dtype, True)
    final_call = _make_bn_residual_call(N, H, W, CP, TH)

    # Pass A: conv1 + bias, accumulating BN1 sum/sumsq.
    y1_raw, sum1, ssq1 = conv1_call(xp_flat, w1, b1, ones, zeros)
    scale1, shift1 = _finalize_bn(sum1, ssq1, g1, be1, N * H * W)

    # Pass B: bn1 + relu fused into conv2's prologue, conv2 + bias, BN2 stats.
    y1_pad = jnp.pad(y1_raw, ((0, 0), (1, 1), (1, 1), (0, 0)))
    y1_flat = y1_pad.reshape(N * (H + 2), W + 2, CP).astype(compute_dtype)
    y2_raw, sum2, ssq2 = conv2_call(y1_flat, w2, b2, scale1, shift1)
    scale2, shift2 = _finalize_bn(sum2, ssq2, g2, be2, N * H * W)

    # Pass C: bn2 + residual + relu.
    out_full = final_call(y2_raw, x_c, scale2, shift2)

    return jnp.transpose(out_full[..., :Cout], (0, 3, 1, 2))


# --------------------------------------------------------------------------- #
# Pure-JAX reference & test                                                    #
# --------------------------------------------------------------------------- #
def reference_block(x, p):
    def conv(x, w, b):
        y = jax.lax.conv_general_dilated(
            x, w, window_strides=(1, 1), padding=((1, 1), (1, 1)),
            dimension_numbers=("NCHW", "OIHW", "NCHW"))
        return y + b[None, :, None, None]

    def bn(x, g, be):
        mean = jnp.mean(x, axis=(0, 2, 3), keepdims=True)
        var = jnp.mean(jnp.square(x - mean), axis=(0, 2, 3), keepdims=True)
        return ((x - mean) * jax.lax.rsqrt(var + EPS)
                * g[None, :, None, None] + be[None, :, None, None])

    y = jnp.maximum(bn(conv(x, p["w1"], p["b1"]), p["g1"], p["be1"]), 0.0)
    y = bn(conv(y, p["w2"], p["b2"]), p["g2"], p["be2"])
    return jnp.maximum(y + x, 0.0)


def init_params(key, c_in, c_out):
    ks = jax.random.split(key, 8)
    return {
        "w1": 0.1 * jax.random.normal(ks[0], (c_out, c_in, 3, 3), jnp.float32),
        "b1": 0.1 * jax.random.normal(ks[1], (c_out,), jnp.float32),
        "w2": 0.1 * jax.random.normal(ks[2], (c_out, c_out, 3, 3), jnp.float32),
        "b2": 0.1 * jax.random.normal(ks[3], (c_out,), jnp.float32),
        "g1": 1.0 + 0.1 * jax.random.normal(ks[4], (c_out,), jnp.float32),
        "be1": 0.1 * jax.random.normal(ks[5], (c_out,), jnp.float32),
        "g2": 1.0 + 0.1 * jax.random.normal(ks[6], (c_out,), jnp.float32),
        "be2": 0.1 * jax.random.normal(ks[7], (c_out,), jnp.float32),
    }


if __name__ == "__main__":
    key = jax.random.PRNGKey(0)
    k_x, k_p = jax.random.split(key)

    N, C, H, W = 2, 8, 16, 16
    x = jax.random.normal(k_x, (N, C, H, W), jnp.float32)
    params = init_params(k_p, C, C)

    ref = jax.block_until_ready(reference_block(x, params))

    # f32 MXU path: tight check against the f32 reference.
    out_f32 = jax.block_until_ready(resnet_block(x, params, compute_dtype=jnp.float32))
    assert out_f32.shape == (N, C, H, W)
    err = float(jnp.max(jnp.abs(out_f32 - ref)))
    assert jnp.allclose(out_f32, ref, atol=2e-3, rtol=2e-3), f"f32 max abs err {err}"

    # bf16 MXU operands (f32 accumulation): looser check vs f32 reference.
    out_bf16 = jax.block_until_ready(resnet_block(x, params, compute_dtype=jnp.bfloat16))
    mean_err = float(jnp.mean(jnp.abs(out_bf16 - ref)))
    assert bool(jnp.all(jnp.isfinite(out_bf16))) and mean_err < 1e-1, \
        f"bf16 mean abs err {mean_err}"

    print("KERNEL_OK")
</pallas_src>

<mosaic_0001>
module attributes {stable_mosaic.version = 11 : i64} {
  func.func @kernel(%arg0: i32, %arg1: i32, %arg2: memref<36x18x128xf32, #tpu.memory_space<any>>, %arg3: memref<1152x128xf32, #tpu.memory_space<vmem>>, %arg4: memref<1x128xf32, #tpu.memory_space<vmem>>, %arg5: memref<1x128xf32, #tpu.memory_space<vmem>>, %arg6: memref<1x128xf32, #tpu.memory_space<vmem>>, %arg7: memref<1x8x16x128xf32, #tpu.memory_space<vmem>>, %arg8: memref<1x8x128xf32, #tpu.memory_space<vmem>>, %arg9: memref<1x8x128xf32, #tpu.memory_space<vmem>>, %arg10: memref<2x10x18x128xf32, #tpu.memory_space<vmem>>, %arg11: memref<128x1152xf32, #tpu.memory_space<vmem>>, %arg12: memref<2x!tpu.dma_semaphore, #tpu.memory_space<semaphore_mem>>) attributes {dimension_semantics = [#tpu.dimension_semantics<parallel>, #tpu.dimension_semantics<arbitrary>], iteration_bounds = array<i64: 2, 2>, scalar_prefetch = 0 : i64, scratch_operands = 3 : i64, tpu.core_type = #tpu.core_type<tc>, window_params = [{}, {pipeline_mode = #tpu.pipeline_mode<synchronous>, transform_indices = @transform_1, window_bounds = array<i64: 1152, 128>}, {pipeline_mode = #tpu.pipeline_mode<synchronous>, transform_indices = @transform_2, window_bounds = array<i64: 1, 128>}, {pipeline_mode = #tpu.pipeline_mode<synchronous>, transform_indices = @transform_3, window_bounds = array<i64: 1, 128>}, {pipeline_mode = #tpu.pipeline_mode<synchronous>, transform_indices = @transform_4, window_bounds = array<i64: 1, 128>}, {transform_indices = @transform_5, window_bounds = array<i64: 1, 8, 16, 128>}, {transform_indices = @transform_6, window_bounds = array<i64: 1, 8, 128>}, {transform_indices = @transform_7, window_bounds = array<i64: 1, 8, 128>}]} {
    %c2_i32 = arith.constant 2 : i32
    %c0_i32 = arith.constant 0 : i32
    %0 = arith.cmpi eq, %c2_i32, %c0_i32 : i32
    %c1_i32 = arith.constant 1 : i32
    %1 = arith.select %0, %c1_i32, %c2_i32 : i32
    %2 = arith.remsi %arg1, %1 : i32
    %c0_i32_0 = arith.constant 0 : i32
    %3 = arith.cmpi ne, %2, %c0_i32_0 : i32
    %c0_i32_1 = arith.constant 0 : i32
    %4 = arith.cmpi slt, %2, %c0_i32_1 : i32
    %c0_i32_2 = arith.constant 0 : i32
    %5 = arith.cmpi slt, %1, %c0_i32_2 : i32
    %6 = arith.xori %4, %5 : i1
    %7 = arith.andi %6, %3 : i1
    %8 = arith.addi %2, %1 : i32
    %9 = arith.select %7, %8, %2 : i32
    %c0_i32_3 = arith.constant 0 : i32
    %10 = arith.cmpi eq, %arg1, %c0_i32_3 : i32
    %11 = arith.extui %10 : i1 to i32
    %c0_i32_4 = arith.constant 0 : i32
    %12 = arith.cmpi ne, %11, %c0_i32_4 : i32
    scf.if %12 {
      %c18_i32_51 = arith.constant 18 : i32
      %84 = arith.muli %arg0, %c18_i32_51 : i32
      %c8_i32_52 = arith.constant 8 : i32
      %85 = arith.muli %arg1, %c8_i32_52 : i32
      %86 = arith.addi %84, %85 : i32
      %c0_i32_53 = arith.constant 0 : i32
      %c0_i32_54 = arith.constant 0 : i32
      %87 = tpu.memref_slice %arg2[%86, %c0_i32_53, %c0_i32_54] : memref<36x18x128xf32, #tpu.memory_space<any>> -> memref<10x18x128xf32, #tpu.memory_space<any>>
      %c0_i32_55 = arith.constant 0 : i32
      %c0_i32_56 = arith.constant 0 : i32
      %c0_i32_57 = arith.constant 0 : i32
      %88 = tpu.memref_slice %arg10[%9, %c0_i32_55, %c0_i32_56, %c0_i32_57] : memref<2x10x18x128xf32, #tpu.memory_space<vmem>> -> memref<1x10x18x128xf32, #tpu.memory_space<vmem>>
      %89 = tpu.memref_squeeze %88 : memref<1x10x18x128xf32, #tpu.memory_space<vmem>> -> memref<10x18x128xf32, #tpu.memory_space<vmem>>
      %90 = tpu.memref_slice %arg12[%9] : memref<2x!tpu.dma_semaphore, #tpu.memory_space<semaphore_mem>> -> memref<1x!tpu.dma_semaphore, #tpu.memory_space<semaphore_mem>>
      %91 = tpu.memref_squeeze %90 : memref<1x!tpu.dma_semaphore, #tpu.memory_space<semaphore_mem>> -> memref<!tpu.dma_semaphore, #tpu.memory_space<semaphore_mem>>
      tpu.enqueue_dma source(%87 : memref<10x18x128xf32, #tpu.memory_space<any>>) target(%89 : memref<10x18x128xf32, #tpu.memory_space<vmem>>) target_semaphore(%91 : memref<!tpu.dma_semaphore, #tpu.memory_space<semaphore_mem>>)
    } else {
    }
    %c18_i32 = arith.constant 18 : i32
    %13 = arith.muli %arg0, %c18_i32 : i32
    %c8_i32 = arith.constant 8 : i32
    %14 = arith.muli %arg1, %c8_i32 : i32
    %15 = arith.addi %13, %14 : i32
    %c0_i32_5 = arith.constant 0 : i32
    %c0_i32_6 = arith.constant 0 : i32
    %16 = tpu.memref_slice %arg2[%15, %c0_i32_5, %c0_i32_6] : memref<36x18x128xf32, #tpu.memory_space<any>> -> memref<10x18x128xf32, #tpu.memory_space<any>>
    %c0_i32_7 = arith.constant 0 : i32
    %c0_i32_8 = arith.constant 0 : i32
    %c0_i32_9 = arith.constant 0 : i32
    %17 = tpu.memref_slice %arg10[%9, %c0_i32_7, %c0_i32_8, %c0_i32_9] : memref<2x10x18x128xf32, #tpu.memory_space<vmem>> -> memref<1x10x18x128xf32, #tpu.memory_space<vmem>>
    %18 = tpu.memref_squeeze %17 : memref<1x10x18x128xf32, #tpu.memory_space<vmem>> -> memref<10x18x128xf32, #tpu.memory_space<vmem>>
    %19 = tpu.memref_slice %arg12[%9] : memref<2x!tpu.dma_semaphore, #tpu.memory_space<semaphore_mem>> -> memref<1x!tpu.dma_semaphore, #tpu.memory_space<semaphore_mem>>
    %20 = tpu.memref_squeeze %19 : memref<1x!tpu.dma_semaphore, #tpu.memory_space<semaphore_mem>> -> memref<!tpu.dma_semaphore, #tpu.memory_space<semaphore_mem>>
    tpu.wait_dma2 semaphore(%20 : memref<!tpu.dma_semaphore, #tpu.memory_space<semaphore_mem>>) src(%16 : memref<10x18x128xf32, #tpu.memory_space<any>>) dst(%18 : memref<10x18x128xf32, #tpu.memory_space<vmem>>)
    %c1_i32_10 = arith.constant 1 : i32
    %21 = arith.addi %arg1, %c1_i32_10 : i32
    %c2_i32_11 = arith.constant 2 : i32
    %22 = arith.cmpi slt, %21, %c2_i32_11 : i32
    %23 = arith.extui %22 : i1 to i32
    %c0_i32_12 = arith.constant 0 : i32
    %24 = arith.cmpi ne, %23, %c0_i32_12 : i32
    scf.if %24 {
      %c1_i32_51 = arith.constant 1 : i32
      %84 = arith.addi %arg1, %c1_i32_51 : i32
      %c1_i32_52 = arith.constant 1 : i32
      %85 = arith.subi %c1_i32_52, %9 : i32
      %c18_i32_53 = arith.constant 18 : i32
      %86 = arith.muli %arg0, %c18_i32_53 : i32
      %c8_i32_54 = arith.constant 8 : i32
      %87 = arith.muli %84, %c8_i32_54 : i32
      %88 = arith.addi %86, %87 : i32
      %c0_i32_55 = arith.constant 0 : i32
      %c0_i32_56 = arith.constant 0 : i32
      %89 = tpu.memref_slice %arg2[%88, %c0_i32_55, %c0_i32_56] : memref<36x18x128xf32, #tpu.memory_space<any>> -> memref<10x18x128xf32, #tpu.memory_space<any>>
      %c0_i32_57 = arith.constant 0 : i32
      %c0_i32_58 = arith.constant 0 : i32
      %c0_i32_59 = arith.constant 0 : i32
      %90 = tpu.memref_slice %arg10[%85, %c0_i32_57, %c0_i32_58, %c0_i32_59] : memref<2x10x18x128xf32, #tpu.memory_space<vmem>> -> memref<1x10x18x128xf32, #tpu.memory_space<vmem>>
      %91 = tpu.memref_squeeze %90 : memref<1x10x18x128xf32, #tpu.memory_space<vmem>> -> memref<10x18x128xf32, #tpu.memory_space<vmem>>
      %92 = tpu.memref_slice %arg12[%85] : memref<2x!tpu.dma_semaphore, #tpu.memory_space<semaphore_mem>> -> memref<1x!tpu.dma_semaphore, #tpu.memory_space<semaphore_mem>>
      %93 = tpu.memref_squeeze %92 : memref<1x!tpu.dma_semaphore, #tpu.memory_space<semaphore_mem>> -> memref<!tpu.dma_semaphore, #tpu.memory_space<semaphore_mem>>
      tpu.enqueue_dma source(%89 : memref<10x18x128xf32, #tpu.memory_space<any>>) target(%91 : memref<10x18x128xf32, #tpu.memory_space<vmem>>) target_semaphore(%93 : memref<!tpu.dma_semaphore, #tpu.memory_space<semaphore_mem>>)
    } else {
    }
    %25 = arith.index_cast %9 : i32 to index
    %c0 = arith.constant 0 : index
    %c0_13 = arith.constant 0 : index
    %c0_14 = arith.constant 0 : index
    %26 = vector.load %arg10[%25, %c0, %c0_13, %c0_14] : memref<2x10x18x128xf32, #tpu.memory_space<vmem>>, vector<1x10x18x128xf32>
    %27 = vector.shape_cast %26 : vector<1x10x18x128xf32> to vector<10x18x128xf32>
    %28 = vector.extract_strided_slice %27 {offsets = [0, 0, 0], sizes = [8, 16, 128], strides = [1, 1, 1]} : vector<10x18x128xf32> to vector<8x16x128xf32>
    %29 = vector.shape_cast %28 : vector<8x16x128xf32> to vector<128x128xf32>
    %c0_15 = arith.constant 0 : index
    %c0_16 = arith.constant 0 : index
    %30 = vector.load %arg11[%c0_15, %c0_16] : memref<128x1152xf32, #tpu.memory_space<vmem>>, vector<128x128xf32>
    tpu.vector_store %arg11[%c0_15, %c0_16], %29 {strides = array<i32>} : memref<128x1152xf32, #tpu.memory_space<vmem>>, vector<128x128xf32>,
    %31 = vector.extract_strided_slice %27 {offsets = [0, 1, 0], sizes = [8, 16, 128], strides = [1, 1, 1]} : vector<10x18x128xf32> to vector<8x16x128xf32>
    %32 = vector.shape_cast %31 : vector<8x16x128xf32> to vector<128x128xf32>
    %c0_17 = arith.constant 0 : index
    %c128 = arith.constant 128 : index
    %33 = vector.load %arg11[%c0_17, %c128] : memref<128x1152xf32, #tpu.memory_space<vmem>>, vector<128x128xf32>
    tpu.vector_store %arg11[%c0_17, %c128], %32 {strides = array<i32>} : memref<128x1152xf32, #tpu.memory_space<vmem>>, vector<128x128xf32>,
    %34 = vector.extract_strided_slice %27 {offsets = [0, 2, 0], sizes = [8, 16, 128], strides = [1, 1, 1]} : vector<10x18x128xf32> to vector<8x16x128xf32>
    %35 = vector.shape_cast %34 : vector<8x16x128xf32> to vector<128x128xf32>
    %c0_18 = arith.constant 0 : index
    %c256 = arith.constant 256 : index
    %36 = vector.load %arg11[%c0_18, %c256] : memref<128x1152xf32, #tpu.memory_space<vmem>>, vector<128x128xf32>
    tpu.vector_store %arg11[%c0_18, %c256], %35 {strides = array<i32>} : memref<128x1152xf32, #tpu.memory_space<vmem>>, vector<128x128xf32>,
    %37 = vector.extract_strided_slice %27 {offsets = [1, 0, 0], sizes = [8, 16, 128], strides = [1, 1, 1]} : vector<10x18x128xf32> to vector<8x16x128xf32>
    %38 = vector.shape_cast %37 : vector<8x16x128xf32> to vector<128x128xf32>
    %c0_19 = arith.constant 0 : index
    %c384 = arith.constant 384 : index
    %39 = vector.load %arg11[%c0_19, %c384] : memref<128x1152xf32, #tpu.memory_space<vmem>>, vector<128x128xf32>
    tpu.vector_store %arg11[%c0_19, %c384], %38 {strides = array<i32>} : memref<128x1152xf32, #tpu.memory_space<vmem>>, vector<128x128xf32>,
    %40 = vector.extract_strided_slice %27 {offsets = [1, 1, 0], sizes = [8, 16, 128], strides = [1, 1, 1]} : vector<10x18x128xf32> to vector<8x16x128xf32>
    %41 = vector.shape_cast %40 : vector<8x16x128xf32> to vector<128x128xf32>
    %c0_20 = arith.constant 0 : index
    %c512 = arith.constant 512 : index
    %42 = vector.load %arg11[%c0_20, %c512] : memref<128x1152xf32, #tpu.memory_space<vmem>>, vector<128x128xf32>
    tpu.vector_store %arg11[%c0_20, %c512], %41 {strides = array<i32>} : memref<128x1152xf32, #tpu.memory_space<vmem>>, vector<128x128xf32>,
    %43 = vector.extract_strided_slice %27 {offsets = [1, 2, 0], sizes = [8, 16, 128], strides = [1, 1, 1]} : vector<10x18x128xf32> to vector<8x16x128xf32>
    %44 = vector.shape_cast %43 : vector<8x16x128xf32> to vector<128x128xf32>
    %c0_21 = arith.constant 0 : index
    %c640 = arith.constant 640 : index
    %45 = vector.load %arg11[%c0_21, %c640] : memref<128x1152xf32, #tpu.memory_space<vmem>>, vector<128x128xf32>
    tpu.vector_store %arg11[%c0_21, %c640], %44 {strides = array<i32>} : memref<128x1152xf32, #tpu.memory_space<vmem>>, vector<128x128xf32>,
    %46 = vector.extract_strided_slice %27 {offsets = [2, 0, 0], sizes = [8, 16, 128], strides = [1, 1, 1]} : vector<10x18x128xf32> to vector<8x16x128xf32>
    %47 = vector.shape_cast %46 : vector<8x16x128xf32> to vector<128x128xf32>
    %c0_22 = arith.constant 0 : index
    %c768 = arith.constant 768 : index
    %48 = vector.load %arg11[%c0_22, %c768] : memref<128x1152xf32, #tpu.memory_space<vmem>>, vector<128x128xf32>
    tpu.vector_store %arg11[%c0_22, %c768], %47 {strides = array<i32>} : memref<128x1152xf32, #tpu.memory_space<vmem>>, vector<128x128xf32>,
    %49 = vector.extract_strided_slice %27 {offsets = [2, 1, 0], sizes = [8, 16, 128], strides = [1, 1, 1]} : vector<10x18x128xf32> to vector<8x16x128xf32>
    %50 = vector.shape_cast %49 : vector<8x16x128xf32> to vector<128x128xf32>
    %c0_23 = arith.constant 0 : index
    %c896 = arith.constant 896 : index
    %51 = vector.load %arg11[%c0_23, %c896] : memref<128x1152xf32, #tpu.memory_space<vmem>>, vector<128x128xf32>
    tpu.vector_store %arg11[%c0_23, %c896], %50 {strides = array<i32>} : memref<128x1152xf32, #tpu.memory_space<vmem>>, vector<128x128xf32>,
    %52 = vector.extract_strided_slice %27 {offsets = [2, 2, 0], sizes = [8, 16, 128], strides = [1, 1, 1]} : vector<10x18x128xf32> to vector<8x16x128xf32>
    %53 = vector.shape_cast %52 : vector<8x16x128xf32> to vector<128x128xf32>
    %c0_24 = arith.constant 0 : index
    %c1024 = arith.constant 1024 : index
    %54 = vector.load %arg11[%c0_24, %c1024] : memref<128x1152xf32, #tpu.memory_space<vmem>>, vector<128x128xf32>
    tpu.vector_store %arg11[%c0_24, %c1024], %53 {strides = array<i32>} : memref<128x1152xf32, #tpu.memory_space<vmem>>, vector<128x128xf32>,
    %c0_25 = arith.constant 0 : index
    %c0_26 = arith.constant 0 : index
    %55 = vector.load %arg11[%c0_25, %c0_26] : memref<128x1152xf32, #tpu.memory_space<vmem>>, vector<128x1152xf32>
    %c0_27 = arith.constant 0 : index
    %c0_28 = arith.constant 0 : index
    %56 = vector.load %arg3[%c0_27, %c0_28] : memref<1152x128xf32, #tpu.memory_space<vmem>>, vector<1152x128xf32>
    %cst = arith.constant dense<0.000000e+00> : vector<128x128xf32>
    %57 = tpu.matmul %55, %56, %cst {dimension_numbers = #tpu.dot_dimension_numbers<[1], [0], [0], [1], [0, 0, 1, 1], [], []>} : vector<128x1152xf32>, vector<1152x128xf32>, vector<128x128xf32> -> vector<128x128xf32>
    %c0_29 = arith.constant 0 : index
    %c0_30 = arith.constant 0 : index
    %58 = vector.load %arg4[%c0_29, %c0_30] : memref<1x128xf32, #tpu.memory_space<vmem>>, vector<1x128xf32>
    %59 = vector.broadcast %58 : vector<1x128xf32> to vector<128x128xf32>
    %60 = arith.addf %57, %59 : vector<128x128xf32>
    %61 = vector.shape_cast %60 : vector<128x128xf32> to vector<8x16x128xf32>
    %c0_31 = arith.constant 0 : index
    %c0_32 = arith.constant 0 : index
    %c0_33 = arith.constant 0 : index
    %c0_34 = arith.constant 0 : index
    %62 = vector.load %arg7[%c0_31, %c0_32, %c0_33, %c0_34] : memref<1x8x16x128xf32, #tpu.memory_space<vmem>>, vector<1x8x16x128xf32>
    %63 = vector.shape_cast %62 : vector<1x8x16x128xf32> to vector<8x16x128xf32>
    %64 = vector.shape_cast %61 : vector<8x16x128xf32> to vector<1x8x16x128xf32>
    tpu.vector_store %arg7[%c0_31, %c0_32, %c0_33, %c0_34], %64 {strides = array<i32>} : memref<1x8x16x128xf32, #tpu.memory_space<vmem>>, vector<1x8x16x128xf32>,
    %c0_i32_35 = arith.constant 0 : i32
    %65 = arith.cmpi eq, %arg1, %c0_i32_35 : i32
    %66 = arith.extui %65 : i1 to i32
    %c0_i32_36 = arith.constant 0 : i32
    %67 = arith.cmpi ne, %66, %c0_i32_36 : i32
    scf.if %67 {
      %cst_51 = arith.constant 0.000000e+00 : f32
      %84 = vector.broadcast %cst_51 : f32 to vector<8x128xf32>
      %c0_52 = arith.constant 0 : index
      %c0_53 = arith.constant 0 : index
      %c0_54 = arith.constant 0 : index
      %85 = vector.load %arg8[%c0_52, %c0_53, %c0_54] : memref<1x8x128xf32, #tpu.memory_space<vmem>>, vector<1x8x128xf32>
      %86 = vector.shape_cast %85 : vector<1x8x128xf32> to vector<8x128xf32>
      %87 = vector.shape_cast %84 : vector<8x128xf32> to vector<1x8x128xf32>
      tpu.vector_store %arg8[%c0_52, %c0_53, %c0_54], %87 {strides = array<i32>} : memref<1x8x128xf32, #tpu.memory_space<vmem>>, vector<1x8x128xf32>,
      %cst_55 = arith.constant 0.000000e+00 : f32
      %88 = vector.broadcast %cst_55 : f32 to vector<8x128xf32>
      %c0_56 = arith.constant 0 : index
      %c0_57 = arith.constant 0 : index
      %c0_58 = arith.constant 0 : index
      %89 = vector.load %arg9[%c0_56, %c0_57, %c0_58] : memref<1x8x128xf32, #tpu.memory_space<vmem>>, vector<1x8x128xf32>
      %90 = vector.shape_cast %89 : vector<1x8x128xf32> to vector<8x128xf32>
      %91 = vector.shape_cast %88 : vector<8x128xf32> to vector<1x8x128xf32>
      tpu.vector_store %arg9[%c0_56, %c0_57, %c0_58], %91 {strides = array<i32>} : memref<1x8x128xf32, #tpu.memory_space<vmem>>, vector<1x8x128xf32>,
    } else {
    }
    %68 = vector.shape_cast %60 : vector<128x128xf32> to vector<16x8x128xf32>
    %c0_37 = arith.constant 0 : index
    %c0_38 = arith.constant 0 : index
    %c0_39 = arith.constant 0 : index
    %69 = vector.load %arg8[%c0_37, %c0_38, %c0_39] : memref<1x8x128xf32, #tpu.memory_space<vmem>>, vector<1x8x128xf32>
    %70 = vector.shape_cast %69 : vector<1x8x128xf32> to vector<8x128xf32>
    %cst_40 = arith.constant dense<0.000000e+00> : vector<8x128xf32>
    %71 = vector.multi_reduction <add>, %68, %cst_40 [0] : vector<16x8x128xf32> to vector<8x128xf32>
    %72 = arith.addf %70, %71 : vector<8x128xf32>
    %c0_41 = arith.constant 0 : index
    %c0_42 = arith.constant 0 : index
    %c0_43 = arith.constant 0 : index
    %73 = vector.load %arg8[%c0_41, %c0_42, %c0_43] : memref<1x8x128xf32, #tpu.memory_space<vmem>>, vector<1x8x128xf32>
    %74 = vector.shape_cast %73 : vector<1x8x128xf32> to vector<8x128xf32>
    %75 = vector.shape_cast %72 : vector<8x128xf32> to vector<1x8x128xf32>
    tpu.vector_store %arg8[%c0_41, %c0_42, %c0_43], %75 {strides = array<i32>} : memref<1x8x128xf32, #tpu.memory_space<vmem>>, vector<1x8x128xf32>,
    %c0_44 = arith.constant 0 : index
    %c0_45 = arith.constant 0 : index
    %c0_46 = arith.constant 0 : index
    %76 = vector.load %arg9[%c0_44, %c0_45, %c0_46] : memref<1x8x128xf32, #tpu.memory_space<vmem>>, vector<1x8x128xf32>
    %77 = vector.shape_cast %76 : vector<1x8x128xf32> to vector<8x128xf32>
    %78 = arith.mulf %68, %68 : vector<16x8x128xf32>
    %cst_47 = arith.constant dense<0.000000e+00> : vector<8x128xf32>
    %79 = vector.multi_reduction <add>, %78, %cst_47 [0] : vector<16x8x128xf32> to vector<8x128xf32>
    %80 = arith.addf %77, %79 : vector<8x128xf32>
    %c0_48 = arith.constant 0 : index
    %c0_49 = arith.constant 0 : index
    %c0_50 = arith.constant 0 : index
    %81 = vector.load %arg9[%c0_48, %c0_49, %c0_50] : memref<1x8x128xf32, #tpu.memory_space<vmem>>, vector<1x8x128xf32>
    %82 = vector.shape_cast %81 : vector<1x8x128xf32> to vector<8x128xf32>
    %83 = vector.shape_cast %80 : vector<8x128xf32> to vector<1x8x128xf32>
    tpu.vector_store %arg9[%c0_48, %c0_49, %c0_50], %83 {strides = array<i32>} : memref<1x8x128xf32, #tpu.memory_space<vmem>>, vector<1x8x128xf32>,
    return
  }
  func.func @transform_1(%arg0: i32, %arg1: i32) -> (i32, i32) {
    %c0_i32 = arith.constant 0 : i32
    %c0_i32_0 = arith.constant 0 : i32
    %c0_i32_1 = arith.constant 0 : i32
    return %c0_i32, %c0_i32_0 : i32, i32
  }
  func.func @transform_2(%arg0: i32, %arg1: i32) -> (i32, i32) {
    %c0_i32 = arith.constant 0 : i32
    %c0_i32_0 = arith.constant 0 : i32
    %c0_i32_1 = arith.constant 0 : i32
    return %c0_i32, %c0_i32_0 : i32, i32
  }
  func.func @transform_3(%arg0: i32, %arg1: i32) -> (i32, i32) {
    %c0_i32 = arith.constant 0 : i32
    %c0_i32_0 = arith.constant 0 : i32
    %c0_i32_1 = arith.constant 0 : i32
    return %c0_i32, %c0_i32_0 : i32, i32
  }
  func.func @transform_4(%arg0: i32, %arg1: i32) -> (i32, i32) {
    %c0_i32 = arith.constant 0 : i32
    %c0_i32_0 = arith.constant 0 : i32
    %c0_i32_1 = arith.constant 0 : i32
    return %c0_i32, %c0_i32_0 : i32, i32
  }
  func.func @transform_5(%arg0: i32, %arg1: i32) -> (i32, i32, i32, i32) {
    %c0_i32 = arith.constant 0 : i32
    %c0_i32_0 = arith.constant 0 : i32
    %c0_i32_1 = arith.constant 0 : i32
    return %arg0, %arg1, %c0_i32, %c0_i32_0 : i32, i32, i32, i32
  }
  func.func @transform_6(%arg0: i32, %arg1: i32) -> (i32, i32, i32) {
    %c0_i32 = arith.constant 0 : i32
    %c0_i32_0 = arith.constant 0 : i32
    %c0_i32_1 = arith.constant 0 : i32
    return %arg0, %c0_i32, %c0_i32_0 : i32, i32, i32
  }
  func.func @transform_7(%arg0: i32, %arg1: i32) -> (i32, i32, i32) {
    %c0_i32 = arith.constant 0 : i32
    %c0_i32_0 = arith.constant 0 : i32
    %c0_i32_1 = arith.constant 0 : i32
    return %arg0, %c0_i32, %c0_i32_0 : i32, i32, i32
  }
}

</mosaic_0001>

<llo_original>
// kernel: tpu_custom_call.1
$region0: #{tpu_custom_call.1}
  #allocation0 [shape = 'u32[]', space=smem, size = 0x4, offset = 0x4, fixed_abs, tag = 'smem constant byte address 0x4 - core index']
  #allocation1 [shape = 'u32[144,128]{1,0:T(1,128)}', space=vmem, size = 0x12000, scoped, tag = 'internal scratch']
  #allocation2 [shape = 'f32[2,10,18,128]{3,2,1,0:T(8,128)}', space=vmem, size = 0x3c000, scoped, tag = 'scratch operand']
  #allocation3 [shape = 'f32[128,1152]{1,0:T(8,128)}', space=vmem, size = 0x90000, scoped, tag = 'scratch operand']
  #allocation4 [shape = 's32[2]{0}', space=sflag, size = 0x8, scoped, tag = 'scratch operand']
  #allocation10 [shape = 's32[]', space=sflag, size = 0x4, offset = 0, fixed_abs, tag = 'sflag constant byte address 0x0 - dummy sync flag']
  #allocation11 [shape = 's32[]', space=sflag, size = 0x4, offset = 0, fixed_abs, tag = 'sflag constant byte address 0x0 - dummy sync flag']
  %s0 = inlined_call_operand.vmem [shape: f32[36,18,128], index: 0, kind: input, shape index: {}]
  %s1 = inlined_call_operand.vmem [shape: f32[1152,128], index: 1, kind: input, shape index: {}]
  %s2 = inlined_call_operand.vmem [shape: f32[1,128], index: 2, kind: input, shape index: {}]
  %s3 = inlined_call_operand.vmem [shape: f32[1,128], index: 3, kind: input, shape index: {}]
  %s4 = inlined_call_operand.vmem [shape: f32[1,128], index: 4, kind: input, shape index: {}]
  %s5 = inlined_call_operand.hbm [shape: f32[2,16,16,128], index: 5, kind: output, shape index: {0}]
  %s6 = inlined_call_operand.hbm [shape: f32[2,8,128], index: 6, kind: output, shape index: {1}]
  %s7 = inlined_call_operand.hbm [shape: f32[2,8,128], index: 7, kind: output, shape index: {2}]
  %8 = xla_tuple %s5, %s6, %s7
  %s9 = sld [smem:[#allocation0]]
  $region151: #{tpu_custom_call.1} parent=0
    _
  %s11 = ssub.s32 1, %s9
  %s12 = scalar_select 0, %s11, %s9
  $region1: #{tpu_custom_call.1} parent=0
    #allocation5 [shape = 'u8[131072]{0}', space=vmem, size = 0x20000, scoped, tag = 'output window, operand 0']
    #allocation6 [shape = 's32[2]{0}', space=sflag, size = 0x8, scoped, tag = 'scoped memory for tpu_custom_call.1']
    #allocation7 [shape = 'u8[8192]{0}', space=vmem, size = 0x2000, scoped, tag = 'output window, operand 1']
    #allocation8 [shape = 's32[2]{0}', space=sflag, size = 0x8, scoped, tag = 'scoped memory for tpu_custom_call.1']
    #allocation9 [shape = 'u8[8192]{0}', space=vmem, size = 0x2000, scoped, tag = 'output window, operand 2']
    %13 = vsyncpa [#allocation6], 0
    %s14 = scalar_lea.sflag [#allocation6], 1
    %15 = vsyncpa %s14, 0
    %16 = vsyncpa [#allocation8], 0
    %s17 = scalar_lea.sflag [#allocation8], 1
    %18 = vsyncpa %s17, 0
    loop: start=0, step=1, limit=6
    $region2: #{tpu_custom_call.1} parent=1 // loop_pre_header
      _
    $region3: #{tpu_custom_call.1} parent=1 // loop_header
      %s20 = sphi 0, %s24
      %p21 = scmp.ge.s32.totalorder %s20, 6
      %s27 = sphi 0, %s39
      %s28 = sphi 0, %s35
      %s29 = sphi 0, %s27
      %s30 = sphi 0, %s28
      %s31 = sphi 0, %s29
      %s32 = sphi 0, %s30
      %s40 = sphi 0, %s40
      %s42 = sphi 0, %s40
      %s43 = sphi 0, %s42
      %s57 = sphi 0, %s43
      %s61 = sphi 0, %s61
      %s63 = sphi 0, %s61
      %s64 = sphi 0, %s63
      %s78 = sphi 0, %s64
      %s82 = sphi 0, %s82
      %s84 = sphi 0, %s82
      %s85 = sphi 0, %s84
      %s99 = sphi 0, %s85
      %s103 = sphi 0, %s103
      %s105 = sphi 0, %s103
      %s106 = sphi 0, %s105
      %s120 = sphi 0, %s106
      %s128 = sphi 0, %s130
      %s131 = sphi 0, %s128
      %s132 = sphi 0, %s131
      %s148 = sphi 0, %s132
      %s154 = sphi 0, %s156
      %s157 = sphi 0, %s154
      %s158 = sphi 0, %s157
      %s174 = sphi 0, %s158
      %s180 = sphi 0, %s182
      %s183 = sphi 0, %s180
      %s184 = sphi 0, %s183
      %s200 = sphi 0, %s184
    $region4: #{tpu_custom_call.1} parent=1 // loop_header_branch
      %23 = sbr.rel (%p21) target = $region8
    $region5: #{tpu_custom_call.1} parent=1 // loop_body
      %s25 = ssub.s32 %s20, 1
      %s26 = ssub.s32 %s20, 2
      %s33 = sadd.s32 1, %s28
      %p34 = scmp.ge.s32.totalorder %s33, 2
      %s35 = scalar_select %p34, 0, %s33
      %s36 = sadd.s32 1, %s27
      %s37 = scalar_select %p34, %s36, %s27
      %p38 = scmp.ge.s32.totalorder %s37, 2
      %s39 = scalar_select %p38, 0, %s37
      %s41 = sadd.s32 %s40, 1
      %p44 = scmp.eq.s32.totalorder %s20, 3
      %p45 = scmp.ne.s32.totalorder %s40, %s42
      %p46 = scmp.eq.s32.totalorder %s20, 0
      %p47 = por %p45, %p46
      %p48 = scmp.ne.s32.totalorder %s40, %s42
      %p49 = scmp.eq.s32.totalorder %s25, 3
      %p50 = por %p48, %p49
      %p51 = scmp.ne.s32.totalorder %s42, %s43
      %p52 = scmp.eq.s32.totalorder %s25, 0
      %p53 = por %p51, %p52
      %p54 = scmp.ne.s32.totalorder %s42, %s43
      %p55 = scmp.eq.s32.totalorder %s26, 3
      %p56 = por %p54, %p55
      %p58 = scmp.ne.s32.totalorder %s43, %s57
      %p59 = scmp.eq.s32.totalorder %s26, 0
      %p60 = por %p58, %p59
      %s62 = sadd.s32 %s61, 1
      %p65 = scmp.eq.s32.totalorder %s20, 3
      %p66 = scmp.ne.s32.totalorder %s61, %s63
      %p67 = scmp.eq.s32.totalorder %s20, 0
      %p68 = por %p66, %p67
      %p69 = scmp.ne.s32.totalorder %s61, %s63
      %p70 = scmp.eq.s32.totalorder %s25, 3
      %p71 = por %p69, %p70
      %p72 = scmp.ne.s32.totalorder %s63, %s64
      %p73 = scmp.eq.s32.totalorder %s25, 0
      %p74 = por %p72, %p73
      %p75 = scmp.ne.s32.totalorder %s63, %s64
      %p76 = scmp.eq.s32.totalorder %s26, 3
      %p77 = por %p75, %p76
      %p79 = scmp.ne.s32.totalorder %s64, %s78
      %p80 = scmp.eq.s32.totalorder %s26, 0
      %p81 = por %p79, %p80
      %s83 = sadd.s32 %s82, 1
      %p86 = scmp.eq.s32.totalorder %s20, 3
      %p87 = scmp.ne.s32.totalorder %s82, %s84
      %p88 = scmp.eq.s32.totalorder %s20, 0
      %p89 = por %p87, %p88
      %p90 = scmp.ne.s32.totalorder %s82, %s84
      %p91 = scmp.eq.s32.totalorder %s25, 3
      %p92 = por %p90, %p91
      %p93 = scmp.ne.s32.totalorder %s84, %s85
      %p94 = scmp.eq.s32.totalorder %s25, 0
      %p95 = por %p93, %p94
      %p96 = scmp.ne.s32.totalorder %s84, %s85
      %p97 = scmp.eq.s32.totalorder %s26, 3
      %p98 = por %p96, %p97
      %p100 = scmp.ne.s32.totalorder %s85, %s99
      %p101 = scmp.eq.s32.totalorder %s26, 0
      %p102 = por %p100, %p101
      %s104 = sadd.s32 %s103, 1
      %p107 = scmp.eq.s32.totalorder %s20, 3
      %p108 = scmp.ne.s32.totalorder %s103, %s105
      %p109 = scmp.eq.s32.totalorder %s20, 0
      %p110 = por %p108, %p109
      %p111 = scmp.ne.s32.totalorder %s103, %s105
      %p112 = scmp.eq.s32.totalorder %s25, 3
      %p113 = por %p111, %p112
      %p114 = scmp.ne.s32.totalorder %s105, %s106
      %p115 = scmp.eq.s32.totalorder %s25, 0
      %p116 = por %p114, %p115
      %p117 = scmp.ne.s32.totalorder %s105, %s106
      %p118 = scmp.eq.s32.totalorder %s26, 3
      %p119 = por %p117, %p118
      %p121 = scmp.ne.s32.totalorder %s106, %s120
      %p122 = scmp.eq.s32.totalorder %s26, 0
      %p123 = por %p121, %p122
      %s124 = ssub.s32 %s27, %s39
      %s125 = ssub.s32 %s28, %s35
      %s126 = sor.u32 %s124, %s125
      %p127 = scmp.eq.s32.totalorder %s126, 0
      %s129 = sadd.s32 %s128, 1
      %s130 = scalar_select %p127, %s128, %s129
      %p133 = pneg %p127
      %p134 = scmp.eq.s32.totalorder %s20, 3
      %p135 = por %p133, %p134
      %p136 = scmp.ne.s32.totalorder %s128, %s131
      %p137 = scmp.eq.s32.totalorder %s20, 0
      %p138 = por %p136, %p137
      %p139 = scmp.ne.s32.totalorder %s128, %s131
      %p140 = scmp.eq.s32.totalorder %s25, 3
      %p141 = por %p139, %p140
      %p142 = scmp.ne.s32.totalorder %s131, %s132
      %p143 = scmp.eq.s32.totalorder %s25, 0
      %p144 = por %p142, %p143
      %p145 = scmp.ne.s32.totalorder %s131, %s132
      %p146 = scmp.eq.s32.totalorder %s26, 3
      %p147 = por %p145, %p146
      %p149 = scmp.ne.s32.totalorder %s132, %s148
      %p150 = scmp.eq.s32.totalorder %s26, 0
      %p151 = por %p149, %p150
      %s152 = ssub.s32 %s27, %s39
      %p153 = scmp.eq.s32.totalorder %s152, 0
      %s155 = sadd.s32 %s154, 1
      %s156 = scalar_select %p153, %s154, %s155
      %p159 = pneg %p153
      %p160 = scmp.eq.s32.totalorder %s20, 3
      %p161 = por %p159, %p160
      %p162 = scmp.ne.s32.totalorder %s154, %s157
      %p163 = scmp.eq.s32.totalorder %s20, 0
      %p164 = por %p162, %p163
      %p165 = scmp.ne.s32.totalorder %s154, %s157
      %p166 = scmp.eq.s32.totalorder %s25, 3
      %p167 = por %p165, %p166
      %p168 = scmp.ne.s32.totalorder %s157, %s158
      %p169 = scmp.eq.s32.totalorder %s25, 0
      %p170 = por %p168, %p169
      %p171 = scmp.ne.s32.totalorder %s157, %s158
      %p172 = scmp.eq.s32.totalorder %s26, 3
      %p173 = por %p171, %p172
      %p175 = scmp.ne.s32.totalorder %s158, %s174
      %p176 = scmp.eq.s32.totalorder %s26, 0
      %p177 = por %p175, %p176
      %s178 = ssub.s32 %s27, %s39
      %p179 = scmp.eq.s32.totalorder %s178, 0
      %s181 = sadd.s32 %s180, 1
      %s182 = scalar_select %p179, %s180, %s181
      %p185 = pneg %p179
      %p186 = scmp.eq.s32.totalorder %s20, 3
      %p187 = por %p185, %p186
      %p188 = scmp.ne.s32.totalorder %s180, %s183
      %p189 = scmp.eq.s32.totalorder %s20, 0
      %p190 = por %p188, %p189
      %p191 = scmp.ne.s32.totalorder %s180, %s183
      %p192 = scmp.eq.s32.totalorder %s25, 3
      %p193 = por %p191, %p192
      %p194 = scmp.ne.s32.totalorder %s183, %s184
      %p195 = scmp.eq.s32.totalorder %s25, 0
      %p196 = por %p194, %p195
      %p197 = scmp.ne.s32.totalorder %s183, %s184
      %p198 = scmp.eq.s32.totalorder %s26, 3
      %p199 = por %p197, %p198
      %p201 = scmp.ne.s32.totalorder %s184, %s200
      %p202 = scmp.eq.s32.totalorder %s26, 0
      %p203 = por %p201, %p202
      %p204 = scmp.le.s32.totalorder 1, %s20
      %p205 = scmp.lt.s32.totalorder %s20, 5
      %p206 = pnand %p204, %p205
      %p207 = pneg %p206
      // Predicated region
      $region9: #{tpu_custom_call.1} parent=5 // pred_check
        _
      $region10: #{tpu_custom_call.1} parent=5 // pred_check_branch
        %209 = sbr.rel (%p206) target = $region12
      $region11: #{tpu_custom_call.1} parent=5 // pred_region
        %s210 = ssub.s32 %s20, 1
        // Predicated region
        $region13: #{tpu_custom_call.1} parent=11 // pred_check
          %p211 = pneg %p53
        $region14: #{tpu_custom_call.1} parent=11 // pred_check_branch
          %213 = sbr.rel (%p211) target = $region16
        $region15: #{tpu_custom_call.1} parent=11 // pred_region
          _
        $region16: #{tpu_custom_call.1} parent=11 // pred_fallthru
          _
        // Predicated region
        $region17: #{tpu_custom_call.1} parent=11 // pred_check
          %p214 = pneg %p74
        $region18: #{tpu_custom_call.1} parent=11 // pred_check_branch
          %216 = sbr.rel (%p214) target = $region20
        $region19: #{tpu_custom_call.1} parent=11 // pred_region
          _
        $region20: #{tpu_custom_call.1} parent=11 // pred_fallthru
          _
        // Predicated region
        $region21: #{tpu_custom_call.1} parent=11 // pred_check
          %p217 = pneg %p95
        $region22: #{tpu_custom_call.1} parent=11 // pred_check_branch
          %219 = sbr.rel (%p217) target = $region24
        $region23: #{tpu_custom_call.1} parent=11 // pred_region
          _
        $region24: #{tpu_custom_call.1} parent=11 // pred_fallthru
          _
        // Predicated region
        $region25: #{tpu_custom_call.1} parent=11 // pred_check
          %p220 = pneg %p116
        $region26: #{tpu_custom_call.1} parent=11 // pred_check_branch
          %222 = sbr.rel (%p220) target = $region28
        $region27: #{tpu_custom_call.1} parent=11 // pred_region
          _
        $region28: #{tpu_custom_call.1} parent=11 // pred_fallthru
          _
      $region12: #{tpu_custom_call.1} parent=5 // pred_fallthru
        _
      %p223 = scmp.lt.s32.totalorder %s20, 4
      // Predicated region
      $region29: #{tpu_custom_call.1} parent=5 // pred_check
        %p224 = pneg %p223
      $region30: #{tpu_custom_call.1} parent=5 // pred_check_branch
        %226 = sbr.rel (%p224) target = $region32
      $region31: #{tpu_custom_call.1} parent=5 // pred_region
        _
      $region32: #{tpu_custom_call.1} parent=5 // pred_fallthru
        _
      %p227 = scmp.le.s32.totalorder 1, %s20
      %p228 = scmp.lt.s32.totalorder %s20, 5
      %p229 = pnand %p227, %p228
      %p230 = pneg %p229
      // Predicated region
      $region33: #{tpu_custom_call.1} parent=5 // pred_check
        _
      $region34: #{tpu_custom_call.1} parent=5 // pred_check_branch
        %232 = sbr.rel (%p229) target = $region36
      $region35: #{tpu_custom_call.1} parent=5 // pred_region
        %s233 = ssub.s32 %s20, 1
        %p234 = pneg %p53
        %p235 = pneg %p50
        %p236 = pneg %p74
        %p237 = pneg %p71
        %p238 = pneg %p95
        %p239 = pneg %p92
        %p240 = pneg %p116
        %p241 = pneg %p113
        %p242 = pneg %p144
        %p243 = pneg %p141
        %s244 = sand.u32 %s131, 1
        %s245 = scalar_lea.sflag [#allocation6], %s244
        %s246 = sand.u32 %s131, 1
        %s247 = smul.addr %s246, 128
        %s248 = scalar_lea.vmem [#allocation5], %s247
        %p249 = pneg %p170
        %p250 = pneg %p167
        %s251 = sand.u32 %s25, 1
        %s252 = scalar_lea.sflag [#allocation8], %s251
        %s253 = sand.u32 %s157, 1
        %s254 = smul.addr %s253, 8
        %s255 = scalar_lea.vmem [#allocation7], %s254
        %p256 = pneg %p196
        %p257 = pneg %p193
        %s258 = sand.u32 %s25, 1
        %s259 = scalar_lea.sflag [#allocation8], %s258
        %s260 = sand.u32 %s183, 1
        %s261 = smul.addr %s260, 8
        %s262 = scalar_lea.vmem [#allocation9], %s261
        %s263 = smul.u32 8, %s30
        %p264 = scmp.lt.s32.totalorder %s30, 0
        %s265 = ssub.s32 0, %s30
        %s266 = scalar_select %p264, %s265, %s30
        %s267 = sand.u32 %s266, 1
        %s268 = ssub.s32 0, %s267
        %s269 = scalar_select %p264, %s268, %s267
        %p270 = scmp.ne.s32.totalorder %s269, 0
        %p271 = scmp.lt.s32.totalorder %s269, 0
        %p272 = pnand %p271, %p270
        %p273 = pneg %p272
        %s274 = sadd.s32 %s269, 2
        %s275 = scalar_select %p273, %s274, %s269
        %p276 = scmp.eq.s32.totalorder %s30, 0
        // Predicated region
        $region37: #{tpu_custom_call.1} parent=35 // pred_check
          %p277 = pneg %p276
        $region38: #{tpu_custom_call.1} parent=35 // pred_check_branch
          %279 = sbr.rel (%p277) target = $region40
        $region39: #{tpu_custom_call.1} parent=35 // pred_region
          %s280 = smul.u32 %s29, 18
          %s281 = smul.u32 %s30, 8
          %s282 = sadd.s32 %s280, %s281
          %s283 = smul.u32 %s282, 24
          %s284 = scalar_lea.vmem %s0, %s283
          %s285 = smul.u32 %s275, 240
          %s286 = scalar_lea.vmem [#allocation2], %s285
          %s287 = scalar_lea.sflag [#allocation4], %s275
          %p289 = scmp.lt.u32.totalorder 18, 8
          %p290 = pneg %p289
          // Predicated region
          $region41: #{tpu_custom_call.1} parent=39 // pred_check
            _
          $region42: #{tpu_custom_call.1} parent=39 // pred_check_branch
            %292 = sbr.rel (%p289) target = $region44
          $region43: #{tpu_custom_call.1} parent=39 // pred_region
            %s325 = sand.u32 18, 7
            %p326 = scmp.eq.s32.totalorder %s325, 0
            %p327 = pneg %p326
            // Predicated region
            $region56: #{tpu_custom_call.1} parent=43 // pred_check
              _
            $region57: #{tpu_custom_call.1} parent=43 // pred_check_branch
              %329 = sbr.rel (%p326) target = $region59
            $region58: #{tpu_custom_call.1} parent=43 // pred_region
              %s330 = sand.u32 18, 7
              %s331 = ssub.s32 18, %s330
              %s332 = scalar_lea.vmem %s284, %s331
              %s333 = ssub.s32 18, %s330
              %s334 = scalar_lea.vmem %s286, %s333 [#allocation2]
              loop: start=0, step=1, limit=1
              $region60: #{tpu_custom_call.1} parent=58 // loop_pre_header
                _
              $region61: #{tpu_custom_call.1} parent=58 // loop_header
                %s336 = sphi 0, %s340
                %p337 = scmp.ge.s32.totalorder %s336, 1
                %s341 = sphi %s284, %s284
                %s342 = sphi %s286, %s286
              $region62: #{tpu_custom_call.1} parent=58 // loop_header_branch
                %339 = sbr.rel (%p337) target = $region66
              $region63: #{tpu_custom_call.1} parent=58 // loop_body
                %v343 = vld [vmem:[%s341] sm:$0xff]
                %344 = vst [vmem:[%s342] sm:$0xff] %v343
                %v345 = vld [vmem:[%s341 + $0x8] sm:$0xff]
                %346 = vst [vmem:[%s342 + $0x8] sm:$0xff] %v345
                %v347 = vld [vmem:[%s341 + $0x18] sm:$0xff]
                %348 = vst [vmem:[%s342 + $0x18] sm:$0xff] %v347
                %v349 = vld [vmem:[%s341 + $0x20] sm:$0xff]
                %350 = vst [vmem:[%s342 + $0x20] sm:$0xff] %v349
                %v351 = vld [vmem:[%s341 + $0x30] sm:$0xff]
                %352 = vst [vmem:[%s342 + $0x30] sm:$0xff] %v351
                %v353 = vld [vmem:[%s341 + $0x38] sm:$0xff]
                %354 = vst [vmem:[%s342 + $0x38] sm:$0xff] %v353
                %v355 = vld [vmem:[%s341 + $0x48] sm:$0xff]
                %356 = vst [vmem:[%s342 + $0x48] sm:$0xff] %v355
                %v357 = vld [vmem:[%s341 + $0x50] sm:$0xff]
                %358 = vst [vmem:[%s342 + $0x50] sm:$0xff] %v357
                %v359 = vld [vmem:[%s341 + $0x60] sm:$0xff]
                %360 = vst [vmem:[%s342 + $0x60] sm:$0xff] %v359
                %v361 = vld [vmem:[%s341 + $0x68] sm:$0xff]
                %362 = vst [vmem:[%s342 + $0x68] sm:$0xff] %v361
                %v363 = vld [vmem:[%s341 + $0x78] sm:$0xff]
                %364 = vst [vmem:[%s342 + $0x78] sm:$0xff] %v363
                %v365 = vld [vmem:[%s341 + $0x80] sm:$0xff]
                %366 = vst [vmem:[%s342 + $0x80] sm:$0xff] %v365
                %v367 = vld [vmem:[%s341 + $0x90] sm:$0xff]
                %368 = vst [vmem:[%s342 + $0x90] sm:$0xff] %v367
                %v369 = vld [vmem:[%s341 + $0x98] sm:$0xff]
                %370 = vst [vmem:[%s342 + $0x98] sm:$0xff] %v369
                %v371 = vld [vmem:[%s341 + $0xa8] sm:$0xff]
                %372 = vst [vmem:[%s342 + $0xa8] sm:$0xff] %v371
                %v373 = vld [vmem:[%s341 + $0xb0] sm:$0xff]
                %374 = vst [vmem:[%s342 + $0xb0] sm:$0xff] %v373
                %v375 = vld [vmem:[%s341 + $0xc0] sm:$0xff]
                %376 = vst [vmem:[%s342 + $0xc0] sm:$0xff] %v375
                %v377 = vld [vmem:[%s341 + $0xc8] sm:$0xff]
                %378 = vst [vmem:[%s342 + $0xc8] sm:$0xff] %v377
                %v379 = vld [vmem:[%s341 + $0xd8] sm:$0xff]
                %380 = vst [vmem:[%s342 + $0xd8] sm:$0xff] %v379
                %v381 = vld [vmem:[%s341 + $0xe0] sm:$0xff]
                %382 = vst [vmem:[%s342 + $0xe0] sm:$0xff] %v381
              $region64: #{tpu_custom_call.1} parent=58 // loop_footer
                %s340 = sadd.s32 1, %s336
              $region65: #{tpu_custom_call.1} parent=58 // loop_footer_branch
                %335 = sbr.rel target = $region61
              $region66: #{tpu_custom_call.1} parent=58 // loop_exit
                _
              %s383 = sshllo.u32 0, %s330
              loop: start=0, step=1, limit=1
              $region67: #{tpu_custom_call.1} parent=58 // loop_pre_header
                _
              $region68: #{tpu_custom_call.1} parent=58 // loop_header
                %s385 = sphi 0, %s389
                %p386 = scmp.ge.s32.totalorder %s385, 1
                %s390 = sphi %s332, %s332
                %s391 = sphi %s334, %s334
              $region69: #{tpu_custom_call.1} parent=58 // loop_header_branch
                %388 = sbr.rel (%p386) target = $region73
              $region70: #{tpu_custom_call.1} parent=58 // loop_body
                %v392 = vld [vmem:[%s390] sm:%s383]
                %393 = vst [vmem:[%s391] sm:%s383] %v392
                %v394 = vld [vmem:[%s390 + $0x18] sm:%s383]
                %395 = vst [vmem:[%s391 + $0x18] sm:%s383] %v394
                %v396 = vld [vmem:[%s390 + $0x30] sm:%s383]
                %397 = vst [vmem:[%s391 + $0x30] sm:%s383] %v396
                %v398 = vld [vmem:[%s390 + $0x48] sm:%s383]
                %399 = vst [vmem:[%s391 + $0x48] sm:%s383] %v398
                %v400 = vld [vmem:[%s390 + $0x60] sm:%s383]
                %401 = vst [vmem:[%s391 + $0x60] sm:%s383] %v400
                %v402 = vld [vmem:[%s390 + $0x78] sm:%s383]
                %403 = vst [vmem:[%s391 + $0x78] sm:%s383] %v402
                %v404 = vld [vmem:[%s390 + $0x90] sm:%s383]
                %405 = vst [vmem:[%s391 + $0x90] sm:%s383] %v404
                %v406 = vld [vmem:[%s390 + $0xa8] sm:%s383]
                %407 = vst [vmem:[%s391 + $0xa8] sm:%s383] %v406
                %v408 = vld [vmem:[%s390 + $0xc0] sm:%s383]
                %409 = vst [vmem:[%s391 + $0xc0] sm:%s383] %v408
                %v410 = vld [vmem:[%s390 + $0xd8] sm:%s383]
                %411 = vst [vmem:[%s391 + $0xd8] sm:%s383] %v410
              $region71: #{tpu_custom_call.1} parent=58 // loop_footer
                %s389 = sadd.s32 1, %s385
              $region72: #{tpu_custom_call.1} parent=58 // loop_footer_branch
                %384 = sbr.rel target = $region68
              $region73: #{tpu_custom_call.1} parent=58 // loop_exit
                _
            $region59: #{tpu_custom_call.1} parent=43 // pred_fallthru
              _
          $region44: #{tpu_custom_call.1} parent=39 // pred_fallthru
            _
          // Predicated region
          $region45: #{tpu_custom_call.1} parent=39 // pred_check
            %p293 = pneg %p289
          $region46: #{tpu_custom_call.1} parent=39 // pred_check_branch
            %295 = sbr.rel (%p293) target = $region48
          $region47: #{tpu_custom_call.1} parent=39 // pred_region
            %s296 = sshllo.u32 0, 18
            loop: start=0, step=1, limit=1
            $region49: #{tpu_custom_call.1} parent=47 // loop_pre_header
              _
            $region50: #{tpu_custom_call.1} parent=47 // loop_header
              %s298 = sphi 0, %s302
              %p299 = scmp.ge.s32.totalorder %s298, 1
              %s303 = sphi %s284, %s284
              %s304 = sphi %s286, %s286
            $region51: #{tpu_custom_call.1} parent=47 // loop_header_branch
              %301 = sbr.rel (%p299) target = $region55
            $region52: #{tpu_custom_call.1} parent=47 // loop_body
              %v305 = vld [vmem:[%s303] sm:%s296]
              %306 = vst [vmem:[%s304] sm:%s296] %v305
              %v307 = vld [vmem:[%s303 + $0x18] sm:%s296]
              %308 = vst [vmem:[%s304 + $0x18] sm:%s296] %v307
              %v309 = vld [vmem:[%s303 + $0x30] sm:%s296]
              %310 = vst [vmem:[%s304 + $0x30] sm:%s296] %v309
              %v311 = vld [vmem:[%s303 + $0x48] sm:%s296]
              %312 = vst [vmem:[%s304 + $0x48] sm:%s296] %v311
              %v313 = vld [vmem:[%s303 + $0x60] sm:%s296]
              %314 = vst [vmem:[%s304 + $0x60] sm:%s296] %v313
              %v315 = vld [vmem:[%s303 + $0x78] sm:%s296]
              %316 = vst [vmem:[%s304 + $0x78] sm:%s296] %v315
              %v317 = vld [vmem:[%s303 + $0x90] sm:%s296]
              %318 = vst [vmem:[%s304 + $0x90] sm:%s296] %v317
              %v319 = vld [vmem:[%s303 + $0xa8] sm:%s296]
              %320 = vst [vmem:[%s304 + $0xa8] sm:%s296] %v319
              %v321 = vld [vmem:[%s303 + $0xc0] sm:%s296]
              %322 = vst [vmem:[%s304 + $0xc0] sm:%s296] %v321
              %v323 = vld [vmem:[%s303 + $0xd8] sm:%s296]
              %324 = vst [vmem:[%s304 + $0xd8] sm:%s296] %v323
            $region53: #{tpu_custom_call.1} parent=47 // loop_footer
              %s302 = sadd.s32 1, %s298
            $region54: #{tpu_custom_call.1} parent=47 // loop_footer_branch
              %297 = sbr.rel target = $region50
            $region55: #{tpu_custom_call.1} parent=47 // loop_exit
              _
          $region48: #{tpu_custom_call.1} parent=39 // pred_fallthru
            _
          // Predicated region
          $region74: #{tpu_custom_call.1} parent=39 // pred_check
            _
          $region75: #{tpu_custom_call.1} parent=39 // pred_check_branch
            %414 = sbr.rel (0) target = $region77
          $region76: #{tpu_custom_call.1} parent=39 // pred_region
            %415 = vsyncadd %s287, 2880
          $region77: #{tpu_custom_call.1} parent=39 // pred_fallthru
            _
        $region40: #{tpu_custom_call.1} parent=35 // pred_fallthru
          _
        %s416 = smul.u32 %s29, 18
        %s417 = smul.u32 %s275, 240
        %s418 = scalar_lea.vmem [#allocation2], %s417
        %s419 = scalar_lea.sflag [#allocation4], %s275
        %s420 = smul.u32 10, 18
        %s421 = smul.u32 %s420, 1
        %s422 = sshll.u32 %s421, 4
        %423 = dma.done %s419, %s422
        %s424 = sadd.s32 %s30, 1
        %p425 = scmp.lt.s32.totalorder %s424, 2
        // Predicated region
        $region78: #{tpu_custom_call.1} parent=35 // pred_check
          %p426 = pneg %p425
        $region79: #{tpu_custom_call.1} parent=35 // pred_check_branch
          %428 = sbr.rel (%p426) target = $region81
        $region80: #{tpu_custom_call.1} parent=35 // pred_region
          %s429 = ssub.s32 1, %s275
          %s430 = smul.u32 %s424, 8
          %s431 = sadd.s32 %s416, %s430
          %s432 = smul.u32 %s431, 24
          %s433 = scalar_lea.vmem %s0, %s432
          %s434 = smul.u32 %s429, 240
          %s435 = scalar_lea.vmem [#allocation2], %s434
          %s436 = scalar_lea.sflag [#allocation4], %s429
          %p438 = scmp.lt.u32.totalorder 18, 8
          %p439 = pneg %p438
          // Predicated region
          $region82: #{tpu_custom_call.1} parent=80 // pred_check
            _
          $region83: #{tpu_custom_call.1} parent=80 // pred_check_branch
            %441 = sbr.rel (%p438) target = $region85
          $region84: #{tpu_custom_call.1} parent=80 // pred_region
            %s474 = sand.u32 18, 7
            %p475 = scmp.eq.s32.totalorder %s474, 0
            %p476 = pneg %p475
            // Predicated region
            $region97: #{tpu_custom_call.1} parent=84 // pred_check
              _
            $region98: #{tpu_custom_call.1} parent=84 // pred_check_branch
              %478 = sbr.rel (%p475) target = $region100
            $region99: #{tpu_custom_call.1} parent=84 // pred_region
              %s479 = sand.u32 18, 7
              %s480 = ssub.s32 18, %s479
              %s481 = scalar_lea.vmem %s433, %s480
              %s482 = ssub.s32 18, %s479
              %s483 = scalar_lea.vmem %s435, %s482 [#allocation2]
              loop: start=0, step=1, limit=1
              $region101: #{tpu_custom_call.1} parent=99 // loop_pre_header
                _
              $region102: #{tpu_custom_call.1} parent=99 // loop_header
                %s485 = sphi 0, %s489
                %p486 = scmp.ge.s32.totalorder %s485, 1
                %s490 = sphi %s433, %s433
                %s491 = sphi %s435, %s435
              $region103: #{tpu_custom_call.1} parent=99 // loop_header_branch
                %488 = sbr.rel (%p486) target = $region107
              $region104: #{tpu_custom_call.1} parent=99 // loop_body
                %v492 = vld [vmem:[%s490] sm:$0xff]
                %493 = vst [vmem:[%s491] sm:$0xff] %v492
                %v494 = vld [vmem:[%s490 + $0x8] sm:$0xff]
                %495 = vst [vmem:[%s491 + $0x8] sm:$0xff] %v494
                %v496 = vld [vmem:[%s490 + $0x18] sm:$0xff]
                %497 = vst [vmem:[%s491 + $0x18] sm:$0xff] %v496
                %v498 = vld [vmem:[%s490 + $0x20] sm:$0xff]
                %499 = vst [vmem:[%s491 + $0x20] sm:$0xff] %v498
                %v500 = vld [vmem:[%s490 + $0x30] sm:$0xff]
                %501 = vst [vmem:[%s491 + $0x30] sm:$0xff] %v500
                %v502 = vld [vmem:[%s490 + $0x38] sm:$0xff]
                %503 = vst [vmem:[%s491 + $0x38] sm:$0xff] %v502
                %v504 = vld [vmem:[%s490 + $0x48] sm:$0xff]
                %505 = vst [vmem:[%s491 + $0x48] sm:$0xff] %v504
                %v506 = vld [vmem:[%s490 + $0x50] sm:$0xff]
                %507 = vst [vmem:[%s491 + $0x50] sm:$0xff] %v506
                %v508 = vld [vmem:[%s490 + $0x60] sm:$0xff]
                %509 = vst [vmem:[%s491 + $0x60] sm:$0xff] %v508
                %v510 = vld [vmem:[%s490 + $0x68] sm:$0xff]
                %511 = vst [vmem:[%s491 + $0x68] sm:$0xff] %v510
                %v512 = vld [vmem:[%s490 + $0x78] sm:$0xff]
                %513 = vst [vmem:[%s491 + $0x78] sm:$0xff] %v512
                %v514 = vld [vmem:[%s490 + $0x80] sm:$0xff]
                %515 = vst [vmem:[%s491 + $0x80] sm:$0xff] %v514
                %v516 = vld [vmem:[%s490 + $0x90] sm:$0xff]
                %517 = vst [vmem:[%s491 + $0x90] sm:$0xff] %v516
                %v518 = vld [vmem:[%s490 + $0x98] sm:$0xff]
                %519 = vst [vmem:[%s491 + $0x98] sm:$0xff] %v518
                %v520 = vld [vmem:[%s490 + $0xa8] sm:$0xff]
                %521 = vst [vmem:[%s491 + $0xa8] sm:$0xff] %v520
                %v522 = vld [vmem:[%s490 + $0xb0] sm:$0xff]
                %523 = vst [vmem:[%s491 + $0xb0] sm:$0xff] %v522
                %v524 = vld [vmem:[%s490 + $0xc0] sm:$0xff]
                %525 = vst [vmem:[%s491 + $0xc0] sm:$0xff] %v524
                %v526 = vld [vmem:[%s490 + $0xc8] sm:$0xff]
                %527 = vst [vmem:[%s491 + $0xc8] sm:$0xff] %v526
                %v528 = vld [vmem:[%s490 + $0xd8] sm:$0xff]
                %529 = vst [vmem:[%s491 + $0xd8] sm:$0xff] %v528
                %v530 = vld [vmem:[%s490 + $0xe0] sm:$0xff]
                %531 = vst [vmem:[%s491 + $0xe0] sm:$0xff] %v530
              $region105: #{tpu_custom_call.1} parent=99 // loop_footer
                %s489 = sadd.s32 1, %s485
              $region106: #{tpu_custom_call.1} parent=99 // loop_footer_branch
                %484 = sbr.rel target = $region102
              $region107: #{tpu_custom_call.1} parent=99 // loop_exit
                _
              %s532 = sshllo.u32 0, %s479
              loop: start=0, step=1, limit=1
              $region108: #{tpu_custom_call.1} parent=99 // loop_pre_header
                _
              $region109: #{tpu_custom_call.1} parent=99 // loop_header
                %s534 = sphi 0, %s538
                %p535 = scmp.ge.s32.totalorder %s534, 1
                %s539 = sphi %s481, %s481
                %s540 = sphi %s483, %s483
              $region110: #{tpu_custom_call.1} parent=99 // loop_header_branch
                %537 = sbr.rel (%p535) target = $region114
              $region111: #{tpu_custom_call.1} parent=99 // loop_body
                %v541 = vld [vmem:[%s539] sm:%s532]
                %542 = vst [vmem:[%s540] sm:%s532] %v541
                %v543 = vld [vmem:[%s539 + $0x18] sm:%s532]
                %544 = vst [vmem:[%s540 + $0x18] sm:%s532] %v543
                %v545 = vld [vmem:[%s539 + $0x30] sm:%s532]
                %546 = vst [vmem:[%s540 + $0x30] sm:%s532] %v545
                %v547 = vld [vmem:[%s539 + $0x48] sm:%s532]
                %548 = vst [vmem:[%s540 + $0x48] sm:%s532] %v547
                %v549 = vld [vmem:[%s539 + $0x60] sm:%s532]
                %550 = vst [vmem:[%s540 + $0x60] sm:%s532] %v549
                %v551 = vld [vmem:[%s539 + $0x78] sm:%s532]
                %552 = vst [vmem:[%s540 + $0x78] sm:%s532] %v551
                %v553 = vld [vmem:[%s539 + $0x90] sm:%s532]
                %554 = vst [vmem:[%s540 + $0x90] sm:%s532] %v553
                %v555 = vld [vmem:[%s539 + $0xa8] sm:%s532]
                %556 = vst [vmem:[%s540 + $0xa8] sm:%s532] %v555
                %v557 = vld [vmem:[%s539 + $0xc0] sm:%s532]
                %558 = vst [vmem:[%s540 + $0xc0] sm:%s532] %v557
                %v559 = vld [vmem:[%s539 + $0xd8] sm:%s532]
                %560 = vst [vmem:[%s540 + $0xd8] sm:%s532] %v559
              $region112: #{tpu_custom_call.1} parent=99 // loop_footer
                %s538 = sadd.s32 1, %s534
              $region113: #{tpu_custom_call.1} parent=99 // loop_footer_branch
                %533 = sbr.rel target = $region109
              $region114: #{tpu_custom_call.1} parent=99 // loop_exit
                _
            $region100: #{tpu_custom_call.1} parent=84 // pred_fallthru
              _
          $region85: #{tpu_custom_call.1} parent=80 // pred_fallthru
            _
          // Predicated region
          $region86: #{tpu_custom_call.1} parent=80 // pred_check
            %p442 = pneg %p438
          $region87: #{tpu_custom_call.1} parent=80 // pred_check_branch
            %444 = sbr.rel (%p442) target = $region89
          $region88: #{tpu_custom_call.1} parent=80 // pred_region
            %s445 = sshllo.u32 0, 18
            loop: start=0, step=1, limit=1
            $region90: #{tpu_custom_call.1} parent=88 // loop_pre_header
              _
            $region91: #{tpu_custom_call.1} parent=88 // loop_header
              %s447 = sphi 0, %s451
              %p448 = scmp.ge.s32.totalorder %s447, 1
              %s452 = sphi %s433, %s433
              %s453 = sphi %s435, %s435
            $region92: #{tpu_custom_call.1} parent=88 // loop_header_branch
              %450 = sbr.rel (%p448) target = $region96
            $region93: #{tpu_custom_call.1} parent=88 // loop_body
              %v454 = vld [vmem:[%s452] sm:%s445]
              %455 = vst [vmem:[%s453] sm:%s445] %v454
              %v456 = vld [vmem:[%s452 + $0x18] sm:%s445]
              %457 = vst [vmem:[%s453 + $0x18] sm:%s445] %v456
              %v458 = vld [vmem:[%s452 + $0x30] sm:%s445]
              %459 = vst [vmem:[%s453 + $0x30] sm:%s445] %v458
              %v460 = vld [vmem:[%s452 + $0x48] sm:%s445]
              %461 = vst [vmem:[%s453 + $0x48] sm:%s445] %v460
              %v462 = vld [vmem:[%s452 + $0x60] sm:%s445]
              %463 = vst [vmem:[%s453 + $0x60] sm:%s445] %v462
              %v464 = vld [vmem:[%s452 + $0x78] sm:%s445]
              %465 = vst [vmem:[%s453 + $0x78] sm:%s445] %v464
              %v466 = vld [vmem:[%s452 + $0x90] sm:%s445]
              %467 = vst [vmem:[%s453 + $0x90] sm:%s445] %v466
              %v468 = vld [vmem:[%s452 + $0xa8] sm:%s445]
              %469 = vst [vmem:[%s453 + $0xa8] sm:%s445] %v468
              %v470 = vld [vmem:[%s452 + $0xc0] sm:%s445]
              %471 = vst [vmem:[%s453 + $0xc0] sm:%s445] %v470
              %v472 = vld [vmem:[%s452 + $0xd8] sm:%s445]
              %473 = vst [vmem:[%s453 + $0xd8] sm:%s445] %v472
            $region94: #{tpu_custom_call.1} parent=88 // loop_footer
              %s451 = sadd.s32 1, %s447
            $region95: #{tpu_custom_call.1} parent=88 // loop_footer_branch
              %446 = sbr.rel target = $region91
            $region96: #{tpu_custom_call.1} parent=88 // loop_exit
              _
          $region89: #{tpu_custom_call.1} parent=80 // pred_fallthru
            _
          // Predicated region
          $region115: #{tpu_custom_call.1} parent=80 // pred_check
            _
          $region116: #{tpu_custom_call.1} parent=80 // pred_check_branch
            %563 = sbr.rel (0) target = $region118
          $region117: #{tpu_custom_call.1} parent=80 // pred_region
            %564 = vsyncadd %s436, 2880
          $region118: #{tpu_custom_call.1} parent=80 // pred_fallthru
            _
        $region81: #{tpu_custom_call.1} parent=35 // pred_fallthru
          _
        %v565 = vld [vmem:[%s418] sm:$0xff]
        %v566 = vld [vmem:[%s418 + $0x8] sm:$0xff]
        %v567 = vld [vmem:[%s418 + $0x10] sm:$0x3]
        %v568 = vld [vmem:[%s418 + $0x18] sm:$0xff]
        %v569 = vld [vmem:[%s418 + $0x20] sm:$0xff]
        %v570 = vld [vmem:[%s418 + $0x28] sm:$0x3]
        %v571 = vld [vmem:[%s418 + $0x30] sm:$0xff]
        %v572 = vld [vmem:[%s418 + $0x38] sm:$0xff]
        %v573 = vld [vmem:[%s418 + $0x40] sm:$0x3]
        %v574 = vld [vmem:[%s418 + $0x48] sm:$0xff]
        %v575 = vld [vmem:[%s418 + $0x50] sm:$0xff]
        %v576 = vld [vmem:[%s418 + $0x58] sm:$0x3]
        %v577 = vld [vmem:[%s418 + $0x60] sm:$0xff]
        %v578 = vld [vmem:[%s418 + $0x68] sm:$0xff]
        %v579 = vld [vmem:[%s418 + $0x70] sm:$0x3]
        %v580 = vld [vmem:[%s418 + $0x78] sm:$0xff]
        %v581 = vld [vmem:[%s418 + $0x80] sm:$0xff]
        %v582 = vld [vmem:[%s418 + $0x88] sm:$0x3]
        %v583 = vld [vmem:[%s418 + $0x90] sm:$0xff]
        %v584 = vld [vmem:[%s418 + $0x98] sm:$0xff]
        %v585 = vld [vmem:[%s418 + $0xa0] sm:$0x3]
        %v586 = vld [vmem:[%s418 + $0xa8] sm:$0xff]
        %v587 = vld [vmem:[%s418 + $0xb0] sm:$0xff]
        %v588 = vld [vmem:[%s418 + $0xb8] sm:$0x3]
        %v589 = vld [vmem:[%s418 + $0xc0] sm:$0xff]
        %v590 = vld [vmem:[%s418 + $0xc8] sm:$0xff]
        %v591 = vld [vmem:[%s418 + $0xd0] sm:$0x3]
        %v592 = vld [vmem:[%s418 + $0xd8] sm:$0xff]
        %v593 = vld [vmem:[%s418 + $0xe0] sm:$0xff]
        %v594 = vld [vmem:[%s418 + $0xe8] sm:$0x3]
        %595 = vst [vmem:[#allocation3] sm:$0xff] %v565
        %596 = vst [vmem:[#allocation3 + $0x48] sm:$0xff] %v566
        %597 = vst [vmem:[#allocation3 + $0x90] sm:$0xff] %v568
        %598 = vst [vmem:[#allocation3 + $0xd8] sm:$0xff] %v569
        %599 = vst [vmem:[#allocation3 + $0x120] sm:$0xff] %v571
        %600 = vst [vmem:[#allocation3 + $0x168] sm:$0xff] %v572
        %601 = vst [vmem:[#allocation3 + $0x1b0] sm:$0xff] %v574
        %602 = vst [vmem:[#allocation3 + $0x1f8] sm:$0xff] %v575
        %603 = vst [vmem:[#allocation3 + $0x240] sm:$0xff] %v577
        %604 = vst [vmem:[#allocation3 + $0x288] sm:$0xff] %v578
        %605 = vst [vmem:[#allocation3 + $0x2d0] sm:$0xff] %v580
        %606 = vst [vmem:[#allocation3 + $0x318] sm:$0xff] %v581
        %607 = vst [vmem:[#allocation3 + $0x360] sm:$0xff] %v583
        %608 = vst [vmem:[#allocation3 + $0x3a8] sm:$0xff] %v584
        %609 = vst [vmem:[#allocation3 + $0x3f0] sm:$0xff] %v586
        %610 = vst [vmem:[#allocation3 + $0x438] sm:$0xff] %v587
        %vm635 = vcmask 1046528
        %v636 = vrot.slane %v565, 1
        %v637 = vrot.slane %v566, 1
        %v638 = vsel %vm635, %v636, %v637
        %v639 = vrot.slane %v567, 1
        %v640 = vsel %vm635, %v637, %v639
        %v641 = vrot.slane %v568, 1
        %v642 = vrot.slane %v569, 1
        %v643 = vsel %vm635, %v641, %v642
        %v644 = vrot.slane %v570, 1
        %v645 = vsel %vm635, %v642, %v644
        %v646 = vrot.slane %v571, 1
        %v647 = vrot.slane %v572, 1
        %v648 = vsel %vm635, %v646, %v647
        %v649 = vrot.slane %v573, 1
        %v650 = vsel %vm635, %v647, %v649
        %v651 = vrot.slane %v574, 1
        %v652 = vrot.slane %v575, 1
        %v653 = vsel %vm635, %v651, %v652
        %v654 = vrot.slane %v576, 1
        %v655 = vsel %vm635, %v652, %v654
        %v656 = vrot.slane %v577, 1
        %v657 = vrot.slane %v578, 1
        %v658 = vsel %vm635, %v656, %v657
        %v659 = vrot.slane %v579, 1
        %v660 = vsel %vm635, %v657, %v659
        %v661 = vrot.slane %v580, 1
        %v662 = vrot.slane %v581, 1
        %v663 = vsel %vm635, %v661, %v662
        %v664 = vrot.slane %v582, 1
        %v665 = vsel %vm635, %v662, %v664
        %v666 = vrot.slane %v583, 1
        %v667 = vrot.slane %v584, 1
        %v668 = vsel %vm635, %v666, %v667
        %v669 = vrot.slane %v585, 1
        %v670 = vsel %vm635, %v667, %v669
        %v671 = vrot.slane %v586, 1
        %v672 = vrot.slane %v587, 1
        %v673 = vsel %vm635, %v671, %v672
        %v674 = vrot.slane %v588, 1
        %v675 = vsel %vm635, %v672, %v674
        %692 = vst [vmem:[#allocation3 + $0x8] sm:$0xff] %v638
        %693 = vst [vmem:[#allocation3 + $0x50] sm:$0xff] %v640
        %694 = vst [vmem:[#allocation3 + $0x98] sm:$0xff] %v643
        %695 = vst [vmem:[#allocation3 + $0xe0] sm:$0xff] %v645
        %696 = vst [vmem:[#allocation3 + $0x128] sm:$0xff] %v648
        %697 = vst [vmem:[#allocation3 + $0x170] sm:$0xff] %v650
        %698 = vst [vmem:[#allocation3 + $0x1b8] sm:$0xff] %v653
        %699 = vst [vmem:[#allocation3 + $0x200] sm:$0xff] %v655
        %700 = vst [vmem:[#allocation3 + $0x248] sm:$0xff] %v658
        %701 = vst [vmem:[#allocation3 + $0x290] sm:$0xff] %v660
        %702 = vst [vmem:[#allocation3 + $0x2d8] sm:$0xff] %v663
        %703 = vst [vmem:[#allocation3 + $0x320] sm:$0xff] %v665
        %704 = vst [vmem:[#allocation3 + $0x368] sm:$0xff] %v668
        %705 = vst [vmem:[#allocation3 + $0x3b0] sm:$0xff] %v670
        %706 = vst [vmem:[#allocation3 + $0x3f8] sm:$0xff] %v673
        %707 = vst [vmem:[#allocation3 + $0x440] sm:$0xff] %v675
        %vm708 = vcmask 1045504
        %v709 = vrot.slane %v565, 2
        %v710 = vrot.slane %v566, 2
        %v711 = vsel %vm708, %v709, %v710
        %v712 = vrot.slane %v567, 2
        %v713 = vsel %vm708, %v710, %v712
        %v714 = vrot.slane %v568, 2
        %v715 = vrot.slane %v569, 2
        %v716 = vsel %vm708, %v714, %v715
        %v717 = vrot.slane %v570, 2
        %v718 = vsel %vm708, %v715, %v717
        %v719 = vrot.slane %v571, 2
        %v720 = vrot.slane %v572, 2
        %v721 = vsel %vm708, %v719, %v720
        %v722 = vrot.slane %v573, 2
        %v723 = vsel %vm708, %v720, %v722
        %v724 = vrot.slane %v574, 2
        %v725 = vrot.slane %v575, 2
        %v726 = vsel %vm708, %v724, %v725
        %v727 = vrot.slane %v576, 2
        %v728 = vsel %vm708, %v725, %v727
        %v729 = vrot.slane %v577, 2
        %v730 = vrot.slane %v578, 2
        %v731 = vsel %vm708, %v729, %v730
        %v732 = vrot.slane %v579, 2
        %v733 = vsel %vm708, %v730, %v732
        %v734 = vrot.slane %v580, 2
        %v735 = vrot.slane %v581, 2
        %v736 = vsel %vm708, %v734, %v735
        %v737 = vrot.slane %v582, 2
        %v738 = vsel %vm708, %v735, %v737
        %v739 = vrot.slane %v583, 2
        %v740 = vrot.slane %v584, 2
        %v741 = vsel %vm708, %v739, %v740
        %v742 = vrot.slane %v585, 2
        %v743 = vsel %vm708, %v740, %v742
        %v744 = vrot.slane %v586, 2
        %v745 = vrot.slane %v587, 2
        %v746 = vsel %vm708, %v744, %v745
        %v747 = vrot.slane %v588, 2
        %v748 = vsel %vm708, %v745, %v747
        %765 = vst [vmem:[#allocation3 + $0x10] sm:$0xff] %v711
        %766 = vst [vmem:[#allocation3 + $0x58] sm:$0xff] %v713
        %767 = vst [vmem:[#allocation3 + $0xa0] sm:$0xff] %v716
        %768 = vst [vmem:[#allocation3 + $0xe8] sm:$0xff] %v718
        %769 = vst [vmem:[#allocation3 + $0x130] sm:$0xff] %v721
        %770 = vst [vmem:[#allocation3 + $0x178] sm:$0xff] %v723
        %771 = vst [vmem:[#allocation3 + $0x1c0] sm:$0xff] %v726
        %772 = vst [vmem:[#allocation3 + $0x208] sm:$0xff] %v728
        %773 = vst [vmem:[#allocation3 + $0x250] sm:$0xff] %v731
        %774 = vst [vmem:[#allocation3 + $0x298] sm:$0xff] %v733
        %775 = vst [vmem:[#allocation3 + $0x2e0] sm:$0xff] %v736
        %776 = vst [vmem:[#allocation3 + $0x328] sm:$0xff] %v738
        %777 = vst [vmem:[#allocation3 + $0x370] sm:$0xff] %v741
        %778 = vst [vmem:[#allocation3 + $0x3b8] sm:$0xff] %v743
        %779 = vst [vmem:[#allocation3 + $0x400] sm:$0xff] %v746
        %780 = vst [vmem:[#allocation3 + $0x448] sm:$0xff] %v748
        %781 = vst [vmem:[#allocation3 + $0x18] sm:$0xff] %v568
        %782 = vst [vmem:[#allocation3 + $0x60] sm:$0xff] %v569
        %783 = vst [vmem:[#allocation3 + $0xa8] sm:$0xff] %v571
        %784 = vst [vmem:[#allocation3 + $0xf0] sm:$0xff] %v572
        %785 = vst [vmem:[#allocation3 + $0x138] sm:$0xff] %v574
        %786 = vst [vmem:[#allocation3 + $0x180] sm:$0xff] %v575
        %787 = vst [vmem:[#allocation3 + $0x1c8] sm:$0xff] %v577
        %788 = vst [vmem:[#allocation3 + $0x210] sm:$0xff] %v578
        %789 = vst [vmem:[#allocation3 + $0x258] sm:$0xff] %v580
        %790 = vst [vmem:[#allocation3 + $0x2a0] sm:$0xff] %v581
        %791 = vst [vmem:[#allocation3 + $0x2e8] sm:$0xff] %v583
        %792 = vst [vmem:[#allocation3 + $0x330] sm:$0xff] %v584
        %793 = vst [vmem:[#allocation3 + $0x378] sm:$0xff] %v586
        %794 = vst [vmem:[#allocation3 + $0x3c0] sm:$0xff] %v587
        %795 = vst [vmem:[#allocation3 + $0x408] sm:$0xff] %v589
        %796 = vst [vmem:[#allocation3 + $0x450] sm:$0xff] %v590
        %v800 = vrot.slane %v589, 1
        %v801 = vrot.slane %v590, 1
        %v802 = vsel %vm635, %v800, %v801
        %v803 = vrot.slane %v591, 1
        %v804 = vsel %vm635, %v801, %v803
        %807 = vst [vmem:[#allocation3 + $0x20] sm:$0xff] %v643
        %808 = vst [vmem:[#allocation3 + $0x68] sm:$0xff] %v645
        %809 = vst [vmem:[#allocation3 + $0xb0] sm:$0xff] %v648
        %810 = vst [vmem:[#allocation3 + $0xf8] sm:$0xff] %v650
        %811 = vst [vmem:[#allocation3 + $0x140] sm:$0xff] %v653
        %812 = vst [vmem:[#allocation3 + $0x188] sm:$0xff] %v655
        %813 = vst [vmem:[#allocation3 + $0x1d0] sm:$0xff] %v658
        %814 = vst [vmem:[#allocation3 + $0x218] sm:$0xff] %v660
        %815 = vst [vmem:[#allocation3 + $0x260] sm:$0xff] %v663
        %816 = vst [vmem:[#allocation3 + $0x2a8] sm:$0xff] %v665
        %817 = vst [vmem:[#allocation3 + $0x2f0] sm:$0xff] %v668
        %818 = vst [vmem:[#allocation3 + $0x338] sm:$0xff] %v670
        %819 = vst [vmem:[#allocation3 + $0x380] sm:$0xff] %v673
        %820 = vst [vmem:[#allocation3 + $0x3c8] sm:$0xff] %v675
        %821 = vst [vmem:[#allocation3 + $0x410] sm:$0xff] %v802
        %822 = vst [vmem:[#allocation3 + $0x458] sm:$0xff] %v804
        %v823 = vrot.slane %v589, 2
        %v824 = vrot.slane %v590, 2
        %v825 = vsel %vm708, %v823, %v824
        %v826 = vrot.slane %v591, 2
        %v827 = vsel %vm708, %v824, %v826
        %830 = vst [vmem:[#allocation3 + $0x28] sm:$0xff] %v716
        %831 = vst [vmem:[#allocation3 + $0x70] sm:$0xff] %v718
        %832 = vst [vmem:[#allocation3 + $0xb8] sm:$0xff] %v721
        %833 = vst [vmem:[#allocation3 + $0x100] sm:$0xff] %v723
        %834 = vst [vmem:[#allocation3 + $0x148] sm:$0xff] %v726
        %835 = vst [vmem:[#allocation3 + $0x190] sm:$0xff] %v728
        %836 = vst [vmem:[#allocation3 + $0x1d8] sm:$0xff] %v731
        %837 = vst [vmem:[#allocation3 + $0x220] sm:$0xff] %v733
        %838 = vst [vmem:[#allocation3 + $0x268] sm:$0xff] %v736
        %839 = vst [vmem:[#allocation3 + $0x2b0] sm:$0xff] %v738
        %840 = vst [vmem:[#allocation3 + $0x2f8] sm:$0xff] %v741
        %841 = vst [vmem:[#allocation3 + $0x340] sm:$0xff] %v743
        %842 = vst [vmem:[#allocation3 + $0x388] sm:$0xff] %v746
        %843 = vst [vmem:[#allocation3 + $0x3d0] sm:$0xff] %v748
        %844 = vst [vmem:[#allocation3 + $0x418] sm:$0xff] %v825
        %845 = vst [vmem:[#allocation3 + $0x460] sm:$0xff] %v827
        %846 = vst [vmem:[#allocation3 + $0x30] sm:$0xff] %v571
        %847 = vst [vmem:[#allocation3 + $0x78] sm:$0xff] %v572
        %848 = vst [vmem:[#allocation3 + $0xc0] sm:$0xff] %v574
        %849 = vst [vmem:[#allocation3 + $0x108] sm:$0xff] %v575
        %850 = vst [vmem:[#allocation3 + $0x150] sm:$0xff] %v577
        %851 = vst [vmem:[#allocation3 + $0x198] sm:$0xff] %v578
        %852 = vst [vmem:[#allocation3 + $0x1e0] sm:$0xff] %v580
        %853 = vst [vmem:[#allocation3 + $0x228] sm:$0xff] %v581
        %854 = vst [vmem:[#allocation3 + $0x270] sm:$0xff] %v583
        %855 = vst [vmem:[#allocation3 + $0x2b8] sm:$0xff] %v584
        %856 = vst [vmem:[#allocation3 + $0x300] sm:$0xff] %v586
        %857 = vst [vmem:[#allocation3 + $0x348] sm:$0xff] %v587
        %858 = vst [vmem:[#allocation3 + $0x390] sm:$0xff] %v589
        %859 = vst [vmem:[#allocation3 + $0x3d8] sm:$0xff] %v590
        %860 = vst [vmem:[#allocation3 + $0x420] sm:$0xff] %v592
        %861 = vst [vmem:[#allocation3 + $0x468] sm:$0xff] %v593
        %v865 = vrot.slane %v592, 1
        %v866 = vrot.slane %v593, 1
        %v867 = vsel %vm635, %v865, %v866
        %v868 = vrot.slane %v594, 1
        %v869 = vsel %vm635, %v866, %v868
        %872 = vst [vmem:[#allocation3 + $0x38] sm:$0xff] %v648
        %873 = vst [vmem:[#allocation3 + $0x80] sm:$0xff] %v650
        %874 = vst [vmem:[#allocation3 + $0xc8] sm:$0xff] %v653
        %875 = vst [vmem:[#allocation3 + $0x110] sm:$0xff] %v655
        %876 = vst [vmem:[#allocation3 + $0x158] sm:$0xff] %v658
        %877 = vst [vmem:[#allocation3 + $0x1a0] sm:$0xff] %v660
        %878 = vst [vmem:[#allocation3 + $0x1e8] sm:$0xff] %v663
        %879 = vst [vmem:[#allocation3 + $0x230] sm:$0xff] %v665
        %880 = vst [vmem:[#allocation3 + $0x278] sm:$0xff] %v668
        %881 = vst [vmem:[#allocation3 + $0x2c0] sm:$0xff] %v670
        %882 = vst [vmem:[#allocation3 + $0x308] sm:$0xff] %v673
        %883 = vst [vmem:[#allocation3 + $0x350] sm:$0xff] %v675
        %884 = vst [vmem:[#allocation3 + $0x398] sm:$0xff] %v802
        %885 = vst [vmem:[#allocation3 + $0x3e0] sm:$0xff] %v804
        %886 = vst [vmem:[#allocation3 + $0x428] sm:$0xff] %v867
        %887 = vst [vmem:[#allocation3 + $0x470] sm:$0xff] %v869
        %v888 = vrot.slane %v592, 2
        %v889 = vrot.slane %v593, 2
        %v890 = vsel %vm708, %v888, %v889
        %v891 = vrot.slane %v594, 2
        %v892 = vsel %vm708, %v889, %v891
        %895 = vst [vmem:[#allocation3 + $0x40] sm:$0xff] %v721
        %896 = vst [vmem:[#allocation3 + $0x88] sm:$0xff] %v723
        %897 = vst [vmem:[#allocation3 + $0xd0] sm:$0xff] %v726
        %898 = vst [vmem:[#allocation3 + $0x118] sm:$0xff] %v728
        %899 = vst [vmem:[#allocation3 + $0x160] sm:$0xff] %v731
        %900 = vst [vmem:[#allocation3 + $0x1a8] sm:$0xff] %v733
        %901 = vst [vmem:[#allocation3 + $0x1f0] sm:$0xff] %v736
        %902 = vst [vmem:[#allocation3 + $0x238] sm:$0xff] %v738
        %903 = vst [vmem:[#allocation3 + $0x280] sm:$0xff] %v741
        %904 = vst [vmem:[#allocation3 + $0x2c8] sm:$0xff] %v743
        %905 = vst [vmem:[#allocation3 + $0x310] sm:$0xff] %v746
        %906 = vst [vmem:[#allocation3 + $0x358] sm:$0xff] %v748
        %907 = vst [vmem:[#allocation3 + $0x3a0] sm:$0xff] %v825
        %908 = vst [vmem:[#allocation3 + $0x3e8] sm:$0xff] %v827
        %909 = vst [vmem:[#allocation3 + $0x430] sm:$0xff] %v890
        %910 = vst [vmem:[#allocation3 + $0x478] sm:$0xff] %v892
        %v911 = vld [vmem:[#allocation3] sm:$0xff]
        %v912 = vld [vmem:[#allocation3 + $0x8] sm:$0xff]
        %v913 = vld [vmem:[#allocation3 + $0x10] sm:$0xff]
        %v914 = vld [vmem:[#allocation3 + $0x18] sm:$0xff]
        %v915 = vld [vmem:[#allocation3 + $0x20] sm:$0xff]
        %v916 = vld [vmem:[#allocation3 + $0x28] sm:$0xff]
        %v917 = vld [vmem:[#allocation3 + $0x30] sm:$0xff]
        %v918 = vld [vmem:[#allocation3 + $0x38] sm:$0xff]
        %v919 = vld [vmem:[#allocation3 + $0x40] sm:$0xff]
        %v920 = vld [vmem:[#allocation3 + $0x48] sm:$0xff]
        %v921 = vld [vmem:[#allocation3 + $0x50] sm:$0xff]
        %v922 = vld [vmem:[#allocation3 + $0x58] sm:$0xff]
        %v923 = vld [vmem:[#allocation3 + $0x60] sm:$0xff]
        %v924 = vld [vmem:[#allocation3 + $0x68] sm:$0xff]
        %v925 = vld [vmem:[#allocation3 + $0x70] sm:$0xff]
        %v926 = vld [vmem:[#allocation3 + $0x78] sm:$0xff]
        %v927 = vld [vmem:[#allocation3 + $0x80] sm:$0xff]
        %v928 = vld [vmem:[#allocation3 + $0x88] sm:$0xff]
        %v929 = vld [vmem:[#allocation3 + $0x90] sm:$0xff]
        %v930 = vld [vmem:[#allocation3 + $0x98] sm:$0xff]
        %v931 = vld [vmem:[#allocation3 + $0xa0] sm:$0xff]
        %v932 = vld [vmem:[#allocation3 + $0xa8] sm:$0xff]
        %v933 = vld [vmem:[#allocation3 + $0xb0] sm:$0xff]
        %v934 = vld [vmem:[#allocation3 + $0xb8] sm:$0xff]
        %v935 = vld [vmem:[#allocation3 + $0xc0] sm:$0xff]
        %v936 = vld [vmem:[#allocation3 + $0xc8] sm:$0xff]
        %v937 = vld [vmem:[#allocation3 + $0xd0] sm:$0xff]
        %v938 = vld [vmem:[#allocation3 + $0xd8] sm:$0xff]
        %v939 = vld [vmem:[#allocation3 + $0xe0] sm:$0xff]
        %v940 = vld [vmem:[#allocation3 + $0xe8] sm:$0xff]
        %v941 = vld [vmem:[#allocation3 + $0xf0] sm:$0xff]
        %v942 = vld [vmem:[#allocation3 + $0xf8] sm:$0xff]
        %v943 = vld [vmem:[#allocation3 + $0x100] sm:$0xff]
        %v944 = vld [vmem:[#allocation3 + $0x108] sm:$0xff]
        %v945 = vld [vmem:[#allocation3 + $0x110] sm:$0xff]
        %v946 = vld [vmem:[#allocation3 + $0x118] sm:$0xff]
        %v947 = vld [vmem:[#allocation3 + $0x120] sm:$0xff]
        %v948 = vld [vmem:[#allocation3 + $0x128] sm:$0xff]
        %v949 = vld [vmem:[#allocation3 + $0x130] sm:$0xff]
        %v950 = vld [vmem:[#allocation3 + $0x138] sm:$0xff]
        %v951 = vld [vmem:[#allocation3 + $0x140] sm:$0xff]
        %v952 = vld [vmem:[#allocation3 + $0x148] sm:$0xff]
        %v953 = vld [vmem:[#allocation3 + $0x150] sm:$0xff]
        %v954 = vld [vmem:[#allocation3 + $0x158] sm:$0xff]
        %v955 = vld [vmem:[#allocation3 + $0x160] sm:$0xff]
        %v956 = vld [vmem:[#allocation3 + $0x168] sm:$0xff]
        %v957 = vld [vmem:[#allocation3 + $0x170] sm:$0xff]
        %v958 = vld [vmem:[#allocation3 + $0x178] sm:$0xff]
        %v959 = vld [vmem:[#allocation3 + $0x180] sm:$0xff]
        %v960 = vld [vmem:[#allocation3 + $0x188] sm:$0xff]
        %v961 = vld [vmem:[#allocation3 + $0x190] sm:$0xff]
        %v962 = vld [vmem:[#allocation3 + $0x198] sm:$0xff]
        %v963 = vld [vmem:[#allocation3 + $0x1a0] sm:$0xff]
        %v964 = vld [vmem:[#allocation3 + $0x1a8] sm:$0xff]
        %v965 = vld [vmem:[#allocation3 + $0x1b0] sm:$0xff]
        %v966 = vld [vmem:[#allocation3 + $0x1b8] sm:$0xff]
        %v967 = vld [vmem:[#allocation3 + $0x1c0] sm:$0xff]
        %v968 = vld [vmem:[#allocation3 + $0x1c8] sm:$0xff]
        %v969 = vld [vmem:[#allocation3 + $0x1d0] sm:$0xff]
        %v970 = vld [vmem:[#allocation3 + $0x1d8] sm:$0xff]
        %v971 = vld [vmem:[#allocation3 + $0x1e0] sm:$0xff]
        %v972 = vld [vmem:[#allocation3 + $0x1e8] sm:$0xff]
        %v973 = vld [vmem:[#allocation3 + $0x1f0] sm:$0xff]
        %v974 = vld [vmem:[#allocation3 + $0x1f8] sm:$0xff]
        %v975 = vld [vmem:[#allocation3 + $0x200] sm:$0xff]
        %v976 = vld [vmem:[#allocation3 + $0x208] sm:$0xff]
        %v977 = vld [vmem:[#allocation3 + $0x210] sm:$0xff]
        %v978 = vld [vmem:[#allocation3 + $0x218] sm:$0xff]
        %v979 = vld [vmem:[#allocation3 + $0x220] sm:$0xff]
        %v980 = vld [vmem:[#allocation3 + $0x228] sm:$0xff]
        %v981 = vld [vmem:[#allocation3 + $0x230] sm:$0xff]
        %v982 = vld [vmem:[#allocation3 + $0x238] sm:$0xff]
        %v983 = vld [vmem:[#allocation3 + $0x240] sm:$0xff]
        %v984 = vld [vmem:[#allocation3 + $0x248] sm:$0xff]
        %v985 = vld [vmem:[#allocation3 + $0x250] sm:$0xff]
        %v986 = vld [vmem:[#allocation3 + $0x258] sm:$0xff]
        %v987 = vld [vmem:[#allocation3 + $0x260] sm:$0xff]
        %v988 = vld [vmem:[#allocation3 + $0x268] sm:$0xff]
        %v989 = vld [vmem:[#allocation3 + $0x270] sm:$0xff]
        %v990 = vld [vmem:[#allocation3 + $0x278] sm:$0xff]
        %v991 = vld [vmem:[#allocation3 + $0x280] sm:$0xff]
        %v992 = vld [vmem:[#allocation3 + $0x288] sm:$0xff]
        %v993 = vld [vmem:[#allocation3 + $0x290] sm:$0xff]
        %v994 = vld [vmem:[#allocation3 + $0x298] sm:$0xff]
        %v995 = vld [vmem:[#allocation3 + $0x2a0] sm:$0xff]
        %v996 = vld [vmem:[#allocation3 + $0x2a8] sm:$0xff]
        %v997 = vld [vmem:[#allocation3 + $0x2b0] sm:$0xff]
        %v998 = vld [vmem:[#allocation3 + $0x2b8] sm:$0xff]
        %v999 = vld [vmem:[#allocation3 + $0x2c0] sm:$0xff]
        %v1000 = vld [vmem:[#allocation3 + $0x2c8] sm:$0xff]
        %v1001 = vld [vmem:[#allocation3 + $0x2d0] sm:$0xff]
        %v1002 = vld [vmem:[#allocation3 + $0x2d8] sm:$0xff]
        %v1003 = vld [vmem:[#allocation3 + $0x2e0] sm:$0xff]
        %v1004 = vld [vmem:[#allocation3 + $0x2e8] sm:$0xff]
        %v1005 = vld [vmem:[#allocation3 + $0x2f0] sm:$0xff]
        %v1006 = vld [vmem:[#allocation3 + $0x2f8] sm:$0xff]
        %v1007 = vld [vmem:[#allocation3 + $0x300] sm:$0xff]
        %v1008 = vld [vmem:[#allocation3 + $0x308] sm:$0xff]
        %v1009 = vld [vmem:[#allocation3 + $0x310] sm:$0xff]
        %v1010 = vld [vmem:[#allocation3 + $0x318] sm:$0xff]
        %v1011 = vld [vmem:[#allocation3 + $0x320] sm:$0xff]
        %v1012 = vld [vmem:[#allocation3 + $0x328] sm:$0xff]
        %v1013 = vld [vmem:[#allocation3 + $0x330] sm:$0xff]
        %v1014 = vld [vmem:[#allocation3 + $0x338] sm:$0xff]
        %v1015 = vld [vmem:[#allocation3 + $0x340] sm:$0xff]
        %v1016 = vld [vmem:[#allocation3 + $0x348] sm:$0xff]
        %v1017 = vld [vmem:[#allocation3 + $0x350] sm:$0xff]
        %v1018 = vld [vmem:[#allocation3 + $0x358] sm:$0xff]
        %v1019 = vld [vmem:[#allocation3 + $0x360] sm:$0xff]
        %v1020 = vld [vmem:[#allocation3 + $0x368] sm:$0xff]
        %v1021 = vld [vmem:[#allocation3 + $0x370] sm:$0xff]
        %v1022 = vld [vmem:[#allocation3 + $0x378] sm:$0xff]
        %v1023 = vld [vmem:[#allocation3 + $0x380] sm:$0xff]
        %v1024 = vld [vmem:[#allocation3 + $0x388] sm:$0xff]
        %v1025 = vld [vmem:[#allocation3 + $0x390] sm:$0xff]
        %v1026 = vld [vmem:[#allocation3 + $0x398] sm:$0xff]
        %v1027 = vld [vmem:[#allocation3 + $0x3a0] sm:$0xff]
        %v1028 = vld [vmem:[#allocation3 + $0x3a8] sm:$0xff]
        %v1029 = vld [vmem:[#allocation3 + $0x3b0] sm:$0xff]
        %v1030 = vld [vmem:[#allocation3 + $0x3b8] sm:$0xff]
        %v1031 = vld [vmem:[#allocation3 + $0x3c0] sm:$0xff]
        %v1032 = vld [vmem:[#allocation3 + $0x3c8] sm:$0xff]
        %v1033 = vld [vmem:[#allocation3 + $0x3d0] sm:$0xff]
        %v1034 = vld [vmem:[#allocation3 + $0x3d8] sm:$0xff]
        %v1035 = vld [vmem:[#allocation3 + $0x3e0] sm:$0xff]
        %v1036 = vld [vmem:[#allocation3 + $0x3e8] sm:$0xff]
        %v1037 = vld [vmem:[#allocation3 + $0x3f0] sm:$0xff]
        %v1038 = vld [vmem:[#allocation3 + $0x3f8] sm:$0xff]
        %v1039 = vld [vmem:[#allocation3 + $0x400] sm:$0xff]
        %v1040 = vld [vmem:[#allocation3 + $0x408] sm:$0xff]
        %v1041 = vld [vmem:[#allocation3 + $0x410] sm:$0xff]
        %v1042 = vld [vmem:[#allocation3 + $0x418] sm:$0xff]
        %v1043 = vld [vmem:[#allocation3 + $0x420] sm:$0xff]
        %v1044 = vld [vmem:[#allocation3 + $0x428] sm:$0xff]
        %v1045 = vld [vmem:[#allocation3 + $0x430] sm:$0xff]
        %v1046 = vld [vmem:[#allocation3 + $0x438] sm:$0xff]
        %v1047 = vld [vmem:[#allocation3 + $0x440] sm:$0xff]
        %v1048 = vld [vmem:[#allocation3 + $0x448] sm:$0xff]
        %v1049 = vld [vmem:[#allocation3 + $0x450] sm:$0xff]
        %v1050 = vld [vmem:[#allocation3 + $0x458] sm:$0xff]
        %v1051 = vld [vmem:[#allocation3 + $0x460] sm:$0xff]
        %v1052 = vld [vmem:[#allocation3 + $0x468] sm:$0xff]
        %v1053 = vld [vmem:[#allocation3 + $0x470] sm:$0xff]
        %v1054 = vld [vmem:[#allocation3 + $0x478] sm:$0xff]
        %v1055 = vld [vmem:[%s1] sm:$0xff]
        %v1056 = vld [vmem:[%s1 + $0x8] sm:$0xff]
        %v1057 = vld [vmem:[%s1 + $0x10] sm:$0xff]
        %v1058 = vld [vmem:[%s1 + $0x18] sm:$0xff]
        %v1059 = vld [vmem:[%s1 + $0x20] sm:$0xff]
        %v1060 = vld [vmem:[%s1 + $0x28] sm:$0xff]
        %v1061 = vld [vmem:[%s1 + $0x30] sm:$0xff]
        %v1062 = vld [vmem:[%s1 + $0x38] sm:$0xff]
        %v1063 = vld [vmem:[%s1 + $0x40] sm:$0xff]
        %v1064 = vld [vmem:[%s1 + $0x48] sm:$0xff]
        %v1065 = vld [vmem:[%s1 + $0x50] sm:$0xff]
        %v1066 = vld [vmem:[%s1 + $0x58] sm:$0xff]
        %v1067 = vld [vmem:[%s1 + $0x60] sm:$0xff]
        %v1068 = vld [vmem:[%s1 + $0x68] sm:$0xff]
        %v1069 = vld [vmem:[%s1 + $0x70] sm:$0xff]
        %v1070 = vld [vmem:[%s1 + $0x78] sm:$0xff]
        %v1071 = vld [vmem:[%s1 + $0x80] sm:$0xff]
        %v1072 = vld [vmem:[%s1 + $0x88] sm:$0xff]
        %v1073 = vld [vmem:[%s1 + $0x90] sm:$0xff]
        %v1074 = vld [vmem:[%s1 + $0x98] sm:$0xff]
        %v1075 = vld [vmem:[%s1 + $0xa0] sm:$0xff]
        %v1076 = vld [vmem:[%s1 + $0xa8] sm:$0xff]
        %v1077 = vld [vmem:[%s1 + $0xb0] sm:$0xff]
        %v1078 = vld [vmem:[%s1 + $0xb8] sm:$0xff]
        %v1079 = vld [vmem:[%s1 + $0xc0] sm:$0xff]
        %v1080 = vld [vmem:[%s1 + $0xc8] sm:$0xff]
        %v1081 = vld [vmem:[%s1 + $0xd0] sm:$0xff]
        %v1082 = vld [vmem:[%s1 + $0xd8] sm:$0xff]
        %v1083 = vld [vmem:[%s1 + $0xe0] sm:$0xff]
        %v1084 = vld [vmem:[%s1 + $0xe8] sm:$0xff]
        %v1085 = vld [vmem:[%s1 + $0xf0] sm:$0xff]
        %v1086 = vld [vmem:[%s1 + $0xf8] sm:$0xff]
        %v1087 = vld [vmem:[%s1 + $0x100] sm:$0xff]
        %v1088 = vld [vmem:[%s1 + $0x108] sm:$0xff]
        %v1089 = vld [vmem:[%s1 + $0x110] sm:$0xff]
        %v1090 = vld [vmem:[%s1 + $0x118] sm:$0xff]
        %v1091 = vld [vmem:[%s1 + $0x120] sm:$0xff]
        %v1092 = vld [vmem:[%s1 + $0x128] sm:$0xff]
        %v1093 = vld [vmem:[%s1 + $0x130] sm:$0xff]
        %v1094 = vld [vmem:[%s1 + $0x138] sm:$0xff]
        %v1095 = vld [vmem:[%s1 + $0x140] sm:$0xff]
        %v1096 = vld [vmem:[%s1 + $0x148] sm:$0xff]
        %v1097 = vld [vmem:[%s1 + $0x150] sm:$0xff]
        %v1098 = vld [vmem:[%s1 + $0x158] sm:$0xff]
        %v1099 = vld [vmem:[%s1 + $0x160] sm:$0xff]
        %v1100 = vld [vmem:[%s1 + $0x168] sm:$0xff]
        %v1101 = vld [vmem:[%s1 + $0x170] sm:$0xff]
        %v1102 = vld [vmem:[%s1 + $0x178] sm:$0xff]
        %v1103 = vld [vmem:[%s1 + $0x180] sm:$0xff]
        %v1104 = vld [vmem:[%s1 + $0x188] sm:$0xff]
        %v1105 = vld [vmem:[%s1 + $0x190] sm:$0xff]
        %v1106 = vld [vmem:[%s1 + $0x198] sm:$0xff]
        %v1107 = vld [vmem:[%s1 + $0x1a0] sm:$0xff]
        %v1108 = vld [vmem:[%s1 + $0x1a8] sm:$0xff]
        %v1109 = vld [vmem:[%s1 + $0x1b0] sm:$0xff]
        %v1110 = vld [vmem:[%s1 + $0x1b8] sm:$0xff]
        %v1111 = vld [vmem:[%s1 + $0x1c0] sm:$0xff]
        %v1112 = vld [vmem:[%s1 + $0x1c8] sm:$0xff]
        %v1113 = vld [vmem:[%s1 + $0x1d0] sm:$0xff]
        %v1114 = vld [vmem:[%s1 + $0x1d8] sm:$0xff]
        %v1115 = vld [vmem:[%s1 + $0x1e0] sm:$0xff]
        %v1116 = vld [vmem:[%s1 + $0x1e8] sm:$0xff]
        %v1117 = vld [vmem:[%s1 + $0x1f0] sm:$0xff]
        %v1118 = vld [vmem:[%s1 + $0x1f8] sm:$0xff]
        %v1119 = vld [vmem:[%s1 + $0x200] sm:$0xff]
        %v1120 = vld [vmem:[%s1 + $0x208] sm:$0xff]
        %v1121 = vld [vmem:[%s1 + $0x210] sm:$0xff]
        %v1122 = vld [vmem:[%s1 + $0x218] sm:$0xff]
        %v1123 = vld [vmem:[%s1 + $0x220] sm:$0xff]
        %v1124 = vld [vmem:[%s1 + $0x228] sm:$0xff]
        %v1125 = vld [vmem:[%s1 + $0x230] sm:$0xff]
        %v1126 = vld [vmem:[%s1 + $0x238] sm:$0xff]
        %v1127 = vld [vmem:[%s1 + $0x240] sm:$0xff]
        %v1128 = vld [vmem:[%s1 + $0x248] sm:$0xff]
        %v1129 = vld [vmem:[%s1 + $0x250] sm:$0xff]
        %v1130 = vld [vmem:[%s1 + $0x258] sm:$0xff]
        %v1131 = vld [vmem:[%s1 + $0x260] sm:$0xff]
        %v1132 = vld [vmem:[%s1 + $0x268] sm:$0xff]
        %v1133 = vld [vmem:[%s1 + $0x270] sm:$0xff]
        %v1134 = vld [vmem:[%s1 + $0x278] sm:$0xff]
        %v1135 = vld [vmem:[%s1 + $0x280] sm:$0xff]
        %v1136 = vld [vmem:[%s1 + $0x288] sm:$0xff]
        %v1137 = vld [vmem:[%s1 + $0x290] sm:$0xff]
        %v1138 = vld [vmem:[%s1 + $0x298] sm:$0xff]
        %v1139 = vld [vmem:[%s1 + $0x2a0] sm:$0xff]
        %v1140 = vld [vmem:[%s1 + $0x2a8] sm:$0xff]
        %v1141 = vld [vmem:[%s1 + $0x2b0] sm:$0xff]
        %v1142 = vld [vmem:[%s1 + $0x2b8] sm:$0xff]
        %v1143 = vld [vmem:[%s1 + $0x2c0] sm:$0xff]
        %v1144 = vld [vmem:[%s1 + $0x2c8] sm:$0xff]
        %v1145 = vld [vmem:[%s1 + $0x2d0] sm:$0xff]
        %v1146 = vld [vmem:[%s1 + $0x2d8] sm:$0xff]
        %v1147 = vld [vmem:[%s1 + $0x2e0] sm:$0xff]
        %v1148 = vld [vmem:[%s1 + $0x2e8] sm:$0xff]
        %v1149 = vld [vmem:[%s1 + $0x2f0] sm:$0xff]
        %v1150 = vld [vmem:[%s1 + $0x2f8] sm:$0xff]
        %v1151 = vld [vmem:[%s1 + $0x300] sm:$0xff]
        %v1152 = vld [vmem:[%s1 + $0x308] sm:$0xff]
        %v1153 = vld [vmem:[%s1 + $0x310] sm:$0xff]
        %v1154 = vld [vmem:[%s1 + $0x318] sm:$0xff]
        %v1155 = vld [vmem:[%s1 + $0x320] sm:$0xff]
        %v1156 = vld [vmem:[%s1 + $0x328] sm:$0xff]
        %v1157 = vld [vmem:[%s1 + $0x330] sm:$0xff]
        %v1158 = vld [vmem:[%s1 + $0x338] sm:$0xff]
        %v1159 = vld [vmem:[%s1 + $0x340] sm:$0xff]
        %v1160 = vld [vmem:[%s1 + $0x348] sm:$0xff]
        %v1161 = vld [vmem:[%s1 + $0x350] sm:$0xff]
        %v1162 = vld [vmem:[%s1 + $0x358] sm:$0xff]
        %v1163 = vld [vmem:[%s1 + $0x360] sm:$0xff]
        %v1164 = vld [vmem:[%s1 + $0x368] sm:$0xff]
        %v1165 = vld [vmem:[%s1 + $0x370] sm:$0xff]
        %v1166 = vld [vmem:[%s1 + $0x378] sm:$0xff]
        %v1167 = vld [vmem:[%s1 + $0x380] sm:$0xff]
        %v1168 = vld [vmem:[%s1 + $0x388] sm:$0xff]
        %v1169 = vld [vmem:[%s1 + $0x390] sm:$0xff]
        %v1170 = vld [vmem:[%s1 + $0x398] sm:$0xff]
        %v1171 = vld [vmem:[%s1 + $0x3a0] sm:$0xff]
        %v1172 = vld [vmem:[%s1 + $0x3a8] sm:$0xff]
        %v1173 = vld [vmem:[%s1 + $0x3b0] sm:$0xff]
        %v1174 = vld [vmem:[%s1 + $0x3b8] sm:$0xff]
        %v1175 = vld [vmem:[%s1 + $0x3c0] sm:$0xff]
        %v1176 = vld [vmem:[%s1 + $0x3c8] sm:$0xff]
        %v1177 = vld [vmem:[%s1 + $0x3d0] sm:$0xff]
        %v1178 = vld [vmem:[%s1 + $0x3d8] sm:$0xff]
        %v1179 = vld [vmem:[%s1 + $0x3e0] sm:$0xff]
        %v1180 = vld [vmem:[%s1 + $0x3e8] sm:$0xff]
        %v1181 = vld [vmem:[%s1 + $0x3f0] sm:$0xff]
        %v1182 = vld [vmem:[%s1 + $0x3f8] sm:$0xff]
        %v1183 = vld [vmem:[%s1 + $0x400] sm:$0xff]
        %v1184 = vld [vmem:[%s1 + $0x408] sm:$0xff]
        %v1185 = vld [vmem:[%s1 + $0x410] sm:$0xff]
        %v1186 = vld [vmem:[%s1 + $0x418] sm:$0xff]
        %v1187 = vld [vmem:[%s1 + $0x420] sm:$0xff]
        %v1188 = vld [vmem:[%s1 + $0x428] sm:$0xff]
        %v1189 = vld [vmem:[%s1 + $0x430] sm:$0xff]
        %v1190 = vld [vmem:[%s1 + $0x438] sm:$0xff]
        %v1191 = vld [vmem:[%s1 + $0x440] sm:$0xff]
        %v1192 = vld [vmem:[%s1 + $0x448] sm:$0xff]
        %v1193 = vld [vmem:[%s1 + $0x450] sm:$0xff]
        %v1194 = vld [vmem:[%s1 + $0x458] sm:$0xff]
        %v1195 = vld [vmem:[%s1 + $0x460] sm:$0xff]
        %v1196 = vld [vmem:[%s1 + $0x468] sm:$0xff]
        %v1197 = vld [vmem:[%s1 + $0x470] sm:$0xff]
        %v1198 = vld [vmem:[%s1 + $0x478] sm:$0xff]
        %v1199 = vld [vmem:[%s2] sm:$0x1]
        %v1201 = vlaneseq
        %v1202 = vshrl.u32 %v1201, 7
        %v1203 = vsub.s32 0, %v1202
        %v1204 = vrot.slane %v1199, %v1203
        %1206 = vmatprep.subr.mxu0 0.0
        %1207 = vmatpush1.msra.mxu0 %v1055
        %1208 = vmatprep.subr.mxu0 0.0
        %1209 = vmatpush1.msra.mxu0 %v1056
        %1210 = vmatprep.subr.mxu0 0.0
        %1211 = vmatpush1.msra.mxu0 %v1057
        %1212 = vmatprep.subr.mxu0 0.0
        %1213 = vmatpush1.msra.mxu0 %v1058
        %1214 = vmatprep.subr.mxu0 0.0
        %1215 = vmatpush1.msra.mxu0 %v1059
        %1216 = vmatprep.subr.mxu0 0.0
        %1217 = vmatpush1.msra.mxu0 %v1060
        %1218 = vmatprep.subr.mxu0 0.0
        %1219 = vmatpush1.msra.mxu0 %v1061
        %1220 = vmatprep.subr.mxu0 0.0
        %1221 = vmatpush1.msra.mxu0 %v1062
        %1222 = vmatprep.subr.mxu0 0.0
        %1223 = vmatpush1.msra.mxu0 %v1063
        %1224 = vmatprep.subr.mxu0 0.0
        %1225 = vmatpush1.msra.mxu0 %v1064
        %1226 = vmatprep.subr.mxu0 0.0
        %1227 = vmatpush1.msra.mxu0 %v1065
        %1228 = vmatprep.subr.mxu0 0.0
        %1229 = vmatpush1.msra.mxu0 %v1066
        %1230 = vmatprep.subr.mxu0 0.0
        %1231 = vmatpush1.msra.mxu0 %v1067
        %1232 = vmatprep.subr.mxu0 0.0
        %1233 = vmatpush1.msra.mxu0 %v1068
        %1234 = vmatprep.subr.mxu0 0.0
        %1235 = vmatpush1.msra.mxu0 %v1069
        %1236 = vmatprep.subr.mxu0 0.0
        %1237 = vmatpush1.msra.mxu0 %v1070
        %1238 = vmatprep.subr.mxu0 0.0
        %1239 = vmatpush1.msra.mxu0 %v1071
        %1240 = vmatprep.subr.mxu0 0.0
        %1241 = vmatpush1.msra.mxu0 %v1072
        %1242 = vmatprep.subr.mxu0 0.0
        %1243 = vmatpush1.msra.mxu0 %v1073
        %1244 = vmatprep.subr.mxu0 0.0
        %1245 = vmatpush1.msra.mxu0 %v1074
        %1246 = vmatprep.subr.mxu0 0.0
        %1247 = vmatpush1.msra.mxu0 %v1075
        %1248 = vmatprep.subr.mxu0 0.0
        %1249 = vmatpush1.msra.mxu0 %v1076
        %1250 = vmatprep.subr.mxu0 0.0
        %1251 = vmatpush1.msra.mxu0 %v1077
        %1252 = vmatprep.subr.mxu0 0.0
        %1253 = vmatpush1.msra.mxu0 %v1078
        %1254 = vmatprep.subr.mxu0 0.0
        %1255 = vmatpush1.msra.mxu0 %v1079
        %1256 = vmatprep.subr.mxu0 0.0
        %1257 = vmatpush1.msra.mxu0 %v1080
        %1258 = vmatprep.subr.mxu0 0.0
        %1259 = vmatpush1.msra.mxu0 %v1081
        %1260 = vmatprep.subr.mxu0 0.0
        %1261 = vmatpush1.msra.mxu0 %v1082
        %1262 = vmatprep.subr.mxu0 0.0
        %1263 = vmatpush1.msra.mxu0 %v1083
        %1264 = vmatprep.subr.mxu0 0.0
        %1265 = vmatpush1.msra.mxu0 %v1084
        %1266 = vmatprep.subr.mxu0 0.0
        %1267 = vmatpush1.msra.mxu0 %v1085
        %1268 = vmatprep.subr.mxu0 0.0
        %1269 = vmatpush1.msra.mxu0 %v1086
        %1270 = vmatprep.mubr.f32.mxu0 %v912
        %1271 = vmatmul.mubr.f32.gmra.mrb[0].mxu0 %v911
        %v1272 = vpop.f32.mrb[0].mxu0
        %v1273 = vadd.f32 %v1204, %v1272
        %v1274 = vpop.f32.mrb[0].mxu0
        %1275 = vmatprep.mubr.f32.mxu0 %v921
        %1276 = vmatmul.mubr.f32.gmra.mrb[0].mxu0 %v920
        %v1277 = vpop.f32.mrb[0].mxu0
        %v1278 = vadd.f32 %v1204, %v1277
        %v1279 = vpop.f32.mrb[0].mxu0
        %1280 = vmatprep.mubr.f32.mxu0 %v930
        %1281 = vmatmul.mubr.f32.gmra.mrb[0].mxu0 %v929
        %v1282 = vpop.f32.mrb[0].mxu0
        %v1283 = vadd.f32 %v1204, %v1282
        %v1284 = vpop.f32.mrb[0].mxu0
        %1285 = vmatprep.mubr.f32.mxu0 %v939
        %1286 = vmatmul.mubr.f32.gmra.mrb[0].mxu0 %v938
        %v1287 = vpop.f32.mrb[0].mxu0
        %v1288 = vadd.f32 %v1204, %v1287
        %v1289 = vpop.f32.mrb[0].mxu0
        %1290 = vmatprep.mubr.f32.mxu0 %v948
        %1291 = vmatmul.mubr.f32.gmra.mrb[0].mxu0 %v947
        %v1292 = vpop.f32.mrb[0].mxu0
        %v1293 = vadd.f32 %v1204, %v1292
        %v1294 = vpop.f32.mrb[0].mxu0
        %1295 = vmatprep.mubr.f32.mxu0 %v957
        %1296 = vmatmul.mubr.f32.gmra.mrb[0].mxu0 %v956
        %v1297 = vpop.f32.mrb[0].mxu0
        %v1298 = vadd.f32 %v1204, %v1297
        %v1299 = vpop.f32.mrb[0].mxu0
        %1300 = vmatprep.mubr.f32.mxu0 %v966
        %1301 = vmatmul.mubr.f32.gmra.mrb[0].mxu0 %v965
        %v1302 = vpop.f32.mrb[0].mxu0
        %v1303 = vadd.f32 %v1204, %v1302
        %v1304 = vpop.f32.mrb[0].mxu0
        %1305 = vmatprep.mubr.f32.mxu0 %v975
        %1306 = vmatmul.mubr.f32.gmra.mrb[0].mxu0 %v974
        %v1307 = vpop.f32.mrb[0].mxu0
        %v1308 = vadd.f32 %v1204, %v1307
        %v1309 = vpop.f32.mrb[0].mxu0
        %1310 = vmatprep.mubr.f32.mxu0 %v984
        %1311 = vmatmul.mubr.f32.gmra.mrb[0].mxu0 %v983
        %v1312 = vpop.f32.mrb[0].mxu0
        %v1313 = vadd.f32 %v1204, %v1312
        %v1314 = vpop.f32.mrb[0].mxu0
        %1315 = vmatprep.mubr.f32.mxu0 %v993
        %1316 = vmatmul.mubr.f32.gmra.mrb[0].mxu0 %v992
        %v1317 = vpop.f32.mrb[0].mxu0
        %v1318 = vadd.f32 %v1204, %v1317
        %v1319 = vpop.f32.mrb[0].mxu0
        %1320 = vmatprep.mubr.f32.mxu0 %v1002
        %1321 = vmatmul.mubr.f32.gmra.mrb[0].mxu0 %v1001
        %v1322 = vpop.f32.mrb[0].mxu0
        %v1323 = vadd.f32 %v1204, %v1322
        %v1324 = vpop.f32.mrb[0].mxu0
        %1325 = vmatprep.mubr.f32.mxu0 %v1011
        %1326 = vmatmul.mubr.f32.gmra.mrb[0].mxu0 %v1010
        %v1327 = vpop.f32.mrb[0].mxu0
        %v1328 = vadd.f32 %v1204, %v1327
        %v1329 = vpop.f32.mrb[0].mxu0
        %1330 = vmatprep.mubr.f32.mxu0 %v1020
        %1331 = vmatmul.mubr.f32.gmra.mrb[0].mxu0 %v1019
        %v1332 = vpop.f32.mrb[0].mxu0
        %v1333 = vadd.f32 %v1204, %v1332
        %v1334 = vpop.f32.mrb[0].mxu0
        %1335 = vmatprep.mubr.f32.mxu0 %v1029
        %1336 = vmatmul.mubr.f32.gmra.mrb[0].mxu0 %v1028
        %v1337 = vpop.f32.mrb[0].mxu0
        %v1338 = vadd.f32 %v1204, %v1337
        %v1339 = vpop.f32.mrb[0].mxu0
        %1340 = vmatprep.mubr.f32.mxu0 %v1038
        %1341 = vmatmul.mubr.f32.gmra.mrb[0].mxu0 %v1037
        %v1342 = vpop.f32.mrb[0].mxu0
        %v1343 = vadd.f32 %v1204, %v1342
        %v1344 = vpop.f32.mrb[0].mxu0
        %1345 = vmatprep.mubr.f32.mxu0 %v1047
        %1346 = vmatmul.mubr.f32.gmra.mrb[0].mxu0 %v1046
        %v1347 = vpop.f32.mrb[0].mxu0
        %v1348 = vadd.f32 %v1204, %v1347
        %v1349 = vpop.f32.mrb[0].mxu0
        %1350 = vdwg.mxu0
        %1351 = vmatprep.subr.mxu0 0.0
        %1352 = vmatpush1.msra.mxu0 %v1087
        %1353 = vmatprep.subr.mxu0 0.0
        %1354 = vmatpush1.msra.mxu0 %v1088
        %1355 = vmatprep.subr.mxu0 0.0
        %1356 = vmatpush1.msra.mxu0 %v1089
        %1357 = vmatprep.subr.mxu0 0.0
        %1358 = vmatpush1.msra.mxu0 %v1090
        %1359 = vmatprep.subr.mxu0 0.0
        %1360 = vmatpush1.msra.mxu0 %v1091
        %1361 = vmatprep.subr.mxu0 0.0
        %1362 = vmatpush1.msra.mxu0 %v1092
        %1363 = vmatprep.subr.mxu0 0.0
        %1364 = vmatpush1.msra.mxu0 %v1093
        %1365 = vmatprep.subr.mxu0 0.0
        %1366 = vmatpush1.msra.mxu0 %v1094
        %1367 = vmatprep.subr.mxu0 0.0
        %1368 = vmatpush1.msra.mxu0 %v1095
        %1369 = vmatprep.subr.mxu0 0.0
        %1370 = vmatpush1.msra.mxu0 %v1096
        %1371 = vmatprep.subr.mxu0 0.0
        %1372 = vmatpush1.msra.mxu0 %v1097
        %1373 = vmatprep.subr.mxu0 0.0
        %1374 = vmatpush1.msra.mxu0 %v1098
        %1375 = vmatprep.subr.mxu0 0.0
        %1376 = vmatpush1.msra.mxu0 %v1099
        %1377 = vmatprep.subr.mxu0 0.0
        %1378 = vmatpush1.msra.mxu0 %v1100
        %1379 = vmatprep.subr.mxu0 0.0
        %1380 = vmatpush1.msra.mxu0 %v1101
        %1381 = vmatprep.subr.mxu0 0.0
        %1382 = vmatpush1.msra.mxu0 %v1102
        %1383 = vmatprep.subr.mxu0 0.0
        %1384 = vmatpush1.msra.mxu0 %v1103
        %1385 = vmatprep.subr.mxu0 0.0
        %1386 = vmatpush1.msra.mxu0 %v1104
        %1387 = vmatprep.subr.mxu0 0.0
        %1388 = vmatpush1.msra.mxu0 %v1105
        %1389 = vmatprep.subr.mxu0 0.0
        %1390 = vmatpush1.msra.mxu0 %v1106
        %1391 = vmatprep.subr.mxu0 0.0
        %1392 = vmatpush1.msra.mxu0 %v1107
        %1393 = vmatprep.subr.mxu0 0.0
        %1394 = vmatpush1.msra.mxu0 %v1108
        %1395 = vmatprep.subr.mxu0 0.0
        %1396 = vmatpush1.msra.mxu0 %v1109
        %1397 = vmatprep.subr.mxu0 0.0
        %1398 = vmatpush1.msra.mxu0 %v1110
        %1399 = vmatprep.subr.mxu0 0.0
        %1400 = vmatpush1.msra.mxu0 %v1111
        %1401 = vmatprep.subr.mxu0 0.0
        %1402 = vmatpush1.msra.mxu0 %v1112
        %1403 = vmatprep.subr.mxu0 0.0
        %1404 = vmatpush1.msra.mxu0 %v1113
        %1405 = vmatprep.subr.mxu0 0.0
        %1406 = vmatpush1.msra.mxu0 %v1114
        %1407 = vmatprep.subr.mxu0 0.0
        %1408 = vmatpush1.msra.mxu0 %v1115
        %1409 = vmatprep.subr.mxu0 0.0
        %1410 = vmatpush1.msra.mxu0 %v1116
        %1411 = vmatprep.subr.mxu0 0.0
        %1412 = vmatpush1.msra.mxu0 %v1117
        %1413 = vmatprep.subr.mxu0 0.0
        %1414 = vmatpush1.msra.mxu0 %v1118
        %1415 = vmatprep.mubr.f32.mxu0 %v914
        %1416 = vmatmul.mubr.f32.gmra.mrb[0].mxu0 %v913
        %v1417 = vpop.f32.mrb[0].mxu0
        %v1418 = vadd.f32 %v1273, %v1417
        %v1419 = vpop.f32.mrb[0].mxu0
        %1420 = vmatprep.mubr.f32.mxu0 %v923
        %1421 = vmatmul.mubr.f32.gmra.mrb[0].mxu0 %v922
        %v1422 = vpop.f32.mrb[0].mxu0
        %v1423 = vadd.f32 %v1278, %v1422
        %v1424 = vpop.f32.mrb[0].mxu0
        %1425 = vmatprep.mubr.f32.mxu0 %v932
        %1426 = vmatmul.mubr.f32.gmra.mrb[0].mxu0 %v931
        %v1427 = vpop.f32.mrb[0].mxu0
        %v1428 = vadd.f32 %v1283, %v1427
        %v1429 = vpop.f32.mrb[0].mxu0
        %1430 = vmatprep.mubr.f32.mxu0 %v941
        %1431 = vmatmul.mubr.f32.gmra.mrb[0].mxu0 %v940
        %v1432 = vpop.f32.mrb[0].mxu0
        %v1433 = vadd.f32 %v1288, %v1432
        %v1434 = vpop.f32.mrb[0].mxu0
        %1435 = vmatprep.mubr.f32.mxu0 %v950
        %1436 = vmatmul.mubr.f32.gmra.mrb[0].mxu0 %v949
        %v1437 = vpop.f32.mrb[0].mxu0
        %v1438 = vadd.f32 %v1293, %v1437
        %v1439 = vpop.f32.mrb[0].mxu0
        %1440 = vmatprep.mubr.f32.mxu0 %v959
        %1441 = vmatmul.mubr.f32.gmra.mrb[0].mxu0 %v958
        %v1442 = vpop.f32.mrb[0].mxu0
        %v1443 = vadd.f32 %v1298, %v1442
        %v1444 = vpop.f32.mrb[0].mxu0
        %1445 = vmatprep.mubr.f32.mxu0 %v968
        %1446 = vmatmul.mubr.f32.gmra.mrb[0].mxu0 %v967
        %v1447 = vpop.f32.mrb[0].mxu0
        %v1448 = vadd.f32 %v1303, %v1447
        %v1449 = vpop.f32.mrb[0].mxu0
        %1450 = vmatprep.mubr.f32.mxu0 %v977
        %1451 = vmatmul.mubr.f32.gmra.mrb[0].mxu0 %v976
        %v1452 = vpop.f32.mrb[0].mxu0
        %v1453 = vadd.f32 %v1308, %v1452
        %v1454 = vpop.f32.mrb[0].mxu0
        %1455 = vmatprep.mubr.f32.mxu0 %v986
        %1456 = vmatmul.mubr.f32.gmra.mrb[0].mxu0 %v985
        %v1457 = vpop.f32.mrb[0].mxu0
        %v1458 = vadd.f32 %v1313, %v1457
        %v1459 = vpop.f32.mrb[0].mxu0
        %1460 = vmatprep.mubr.f32.mxu0 %v995
        %1461 = vmatmul.mubr.f32.gmra.mrb[0].mxu0 %v994
        %v1462 = vpop.f32.mrb[0].mxu0
        %v1463 = vadd.f32 %v1318, %v1462
        %v1464 = vpop.f32.mrb[0].mxu0
        %1465 = vmatprep.mubr.f32.mxu0 %v1004
        %1466 = vmatmul.mubr.f32.gmra.mrb[0].mxu0 %v1003
        %v1467 = vpop.f32.mrb[0].mxu0
        %v1468 = vadd.f32 %v1323, %v1467
        %v1469 = vpop.f32.mrb[0].mxu0
        %1470 = vmatprep.mubr.f32.mxu0 %v1013
        %1471 = vmatmul.mubr.f32.gmra.mrb[0].mxu0 %v1012
        %v1472 = vpop.f32.mrb[0].mxu0
        %v1473 = vadd.f32 %v1328, %v1472
        %v1474 = vpop.f32.mrb[0].mxu0
        %1475 = vmatprep.mubr.f32.mxu0 %v1022
        %1476 = vmatmul.mubr.f32.gmra.mrb[0].mxu0 %v1021
        %v1477 = vpop.f32.mrb[0].mxu0
        %v1478 = vadd.f32 %v1333, %v1477
        %v1479 = vpop.f32.mrb[0].mxu0
        %1480 = vmatprep.mubr.f32.mxu0 %v1031
        %1481 = vmatmul.mubr.f32.gmra.mrb[0].mxu0 %v1030
        %v1482 = vpop.f32.mrb[0].mxu0
        %v1483 = vadd.f32 %v1338, %v1482
        %v1484 = vpop.f32.mrb[0].mxu0
        %1485 = vmatprep.mubr.f32.mxu0 %v1040
        %1486 = vmatmul.mubr.f32.gmra.mrb[0].mxu0 %v1039
        %v1487 = vpop.f32.mrb[0].mxu0
        %v1488 = vadd.f32 %v1343, %v1487
        %v1489 = vpop.f32.mrb[0].mxu0
        %1490 = vmatprep.mubr.f32.mxu0 %v1049
        %1491 = vmatmul.mubr.f32.gmra.mrb[0].mxu0 %v1048
        %v1492 = vpop.f32.mrb[0].mxu0
        %v1493 = vadd.f32 %v1348, %v1492
        %v1494 = vpop.f32.mrb[0].mxu0
        %1495 = vdwg.mxu0
        %1496 = vmatprep.subr.mxu0 0.0
        %1497 = vmatpush1.msra.mxu0 %v1119
        %1498 = vmatprep.subr.mxu0 0.0
        %1499 = vmatpush1.msra.mxu0 %v1120
        %1500 = vmatprep.subr.mxu0 0.0
        %1501 = vmatpush1.msra.mxu0 %v1121
        %1502 = vmatprep.subr.mxu0 0.0
        %1503 = vmatpush1.msra.mxu0 %v1122
        %1504 = vmatprep.subr.mxu0 0.0
        %1505 = vmatpush1.msra.mxu0 %v1123
        %1506 = vmatprep.subr.mxu0 0.0
        %1507 = vmatpush1.msra.mxu0 %v1124
        %1508 = vmatprep.subr.mxu0 0.0
        %1509 = vmatpush1.msra.mxu0 %v1125
        %1510 = vmatprep.subr.mxu0 0.0
        %1511 = vmatpush1.msra.mxu0 %v1126
        %1512 = vmatprep.subr.mxu0 0.0
        %1513 = vmatpush1.msra.mxu0 %v1127
        %1514 = vmatprep.subr.mxu0 0.0
        %1515 = vmatpush1.msra.mxu0 %v1128
        %1516 = vmatprep.subr.mxu0 0.0
        %1517 = vmatpush1.msra.mxu0 %v1129
        %1518 = vmatprep.subr.mxu0 0.0
        %1519 = vmatpush1.msra.mxu0 %v1130
        %1520 = vmatprep.subr.mxu0 0.0
        %1521 = vmatpush1.msra.mxu0 %v1131
        %1522 = vmatprep.subr.mxu0 0.0
        %1523 = vmatpush1.msra.mxu0 %v1132
        %1524 = vmatprep.subr.mxu0 0.0
        %1525 = vmatpush1.msra.mxu0 %v1133
        %1526 = vmatprep.subr.mxu0 0.0
        %1527 = vmatpush1.msra.mxu0 %v1134
        %1528 = vmatprep.subr.mxu0 0.0
        %1529 = vmatpush1.msra.mxu0 %v1135
        %1530 = vmatprep.subr.mxu0 0.0
        %1531 = vmatpush1.msra.mxu0 %v1136
        %1532 = vmatprep.subr.mxu0 0.0
        %1533 = vmatpush1.msra.mxu0 %v1137
        %1534 = vmatprep.subr.mxu0 0.0
        %1535 = vmatpush1.msra.mxu0 %v1138
        %1536 = vmatprep.subr.mxu0 0.0
        %1537 = vmatpush1.msra.mxu0 %v1139
        %1538 = vmatprep.subr.mxu0 0.0
        %1539 = vmatpush1.msra.mxu0 %v1140
        %1540 = vmatprep.subr.mxu0 0.0
        %1541 = vmatpush1.msra.mxu0 %v1141
        %1542 = vmatprep.subr.mxu0 0.0
        %1543 = vmatpush1.msra.mxu0 %v1142
        %1544 = vmatprep.subr.mxu0 0.0
        %1545 = vmatpush1.msra.mxu0 %v1143
        %1546 = vmatprep.subr.mxu0 0.0
        %1547 = vmatpush1.msra.mxu0 %v1144
        %1548 = vmatprep.subr.mxu0 0.0
        %1549 = vmatpush1.msra.mxu0 %v1145
        %1550 = vmatprep.subr.mxu0 0.0
        %1551 = vmatpush1.msra.mxu0 %v1146
        %1552 = vmatprep.subr.mxu0 0.0
        %1553 = vmatpush1.msra.mxu0 %v1147
        %1554 = vmatprep.subr.mxu0 0.0
        %1555 = vmatpush1.msra.mxu0 %v1148
        %1556 = vmatprep.subr.mxu0 0.0
        %1557 = vmatpush1.msra.mxu0 %v1149
        %1558 = vmatprep.subr.mxu0 0.0
        %1559 = vmatpush1.msra.mxu0 %v1150
        %1560 = vmatprep.mubr.f32.mxu0 %v916
        %1561 = vmatmul.mubr.f32.gmra.mrb[0].mxu0 %v915
        %v1562 = vpop.f32.mrb[0].mxu0
        %v1563 = vadd.f32 %v1418, %v1562
        %v1564 = vpop.f32.mrb[0].mxu0
        %1565 = vmatprep.mubr.f32.mxu0 %v925
        %1566 = vmatmul.mubr.f32.gmra.mrb[0].mxu0 %v924
        %v1567 = vpop.f32.mrb[0].mxu0
        %v1568 = vadd.f32 %v1423, %v1567
        %v1569 = vpop.f32.mrb[0].mxu0
        %1570 = vmatprep.mubr.f32.mxu0 %v934
        %1571 = vmatmul.mubr.f32.gmra.mrb[0].mxu0 %v933
        %v1572 = vpop.f32.mrb[0].mxu0
        %v1573 = vadd.f32 %v1428, %v1572
        %v1574 = vpop.f32.mrb[0].mxu0
        %1575 = vmatprep.mubr.f32.mxu0 %v943
        %1576 = vmatmul.mubr.f32.gmra.mrb[0].mxu0 %v942
        %v1577 = vpop.f32.mrb[0].mxu0
        %v1578 = vadd.f32 %v1433, %v1577
        %v1579 = vpop.f32.mrb[0].mxu0
        %1580 = vmatprep.mubr.f32.mxu0 %v952
        %1581 = vmatmul.mubr.f32.gmra.mrb[0].mxu0 %v951
        %v1582 = vpop.f32.mrb[0].mxu0
        %v1583 = vadd.f32 %v1438, %v1582
        %v1584 = vpop.f32.mrb[0].mxu0
        %1585 = vmatprep.mubr.f32.mxu0 %v961
        %1586 = vmatmul.mubr.f32.gmra.mrb[0].mxu0 %v960
        %v1587 = vpop.f32.mrb[0].mxu0
        %v1588 = vadd.f32 %v1443, %v1587
        %v1589 = vpop.f32.mrb[0].mxu0
        %1590 = vmatprep.mubr.f32.mxu0 %v970
        %1591 = vmatmul.mubr.f32.gmra.mrb[0].mxu0 %v969
        %v1592 = vpop.f32.mrb[0].mxu0
        %v1593 = vadd.f32 %v1448, %v1592
        %v1594 = vpop.f32.mrb[0].mxu0
        %1595 = vmatprep.mubr.f32.mxu0 %v979
        %1596 = vmatmul.mubr.f32.gmra.mrb[0].mxu0 %v978
        %v1597 = vpop.f32.mrb[0].mxu0
        %v1598 = vadd.f32 %v1453, %v1597
        %v1599 = vpop.f32.mrb[0].mxu0
        %1600 = vmatprep.mubr.f32.mxu0 %v988
        %1601 = vmatmul.mubr.f32.gmra.mrb[0].mxu0 %v987
        %v1602 = vpop.f32.mrb[0].mxu0
        %v1603 = vadd.f32 %v1458, %v1602
        %v1604 = vpop.f32.mrb[0].mxu0
        %1605 = vmatprep.mubr.f32.mxu0 %v997
        %1606 = vmatmul.mubr.f32.gmra.mrb[0].mxu0 %v996
        %v1607 = vpop.f32.mrb[0].mxu0
        %v1608 = vadd.f32 %v1463, %v1607
        %v1609 = vpop.f32.mrb[0].mxu0
        %1610 = vmatprep.mubr.f32.mxu0 %v1006
        %1611 = vmatmul.mubr.f32.gmra.mrb[0].mxu0 %v1005
        %v1612 = vpop.f32.mrb[0].mxu0
        %v1613 = vadd.f32 %v1468, %v1612
        %v1614 = vpop.f32.mrb[0].mxu0
        %1615 = vmatprep.mubr.f32.mxu0 %v1015
        %1616 = vmatmul.mubr.f32.gmra.mrb[0].mxu0 %v1014
        %v1617 = vpop.f32.mrb[0].mxu0
        %v1618 = vadd.f32 %v1473, %v1617
        %v1619 = vpop.f32.mrb[0].mxu0
        %1620 = vmatprep.mubr.f32.mxu0 %v1024
        %1621 = vmatmul.mubr.f32.gmra.mrb[0].mxu0 %v1023
        %v1622 = vpop.f32.mrb[0].mxu0
        %v1623 = vadd.f32 %v1478, %v1622
        %v1624 = vpop.f32.mrb[0].mxu0
        %1625 = vmatprep.mubr.f32.mxu0 %v1033
        %1626 = vmatmul.mubr.f32.gmra.mrb[0].mxu0 %v1032
        %v1627 = vpop.f32.mrb[0].mxu0
        %v1628 = vadd.f32 %v1483, %v1627
        %v1629 = vpop.f32.mrb[0].mxu0
        %1630 = vmatprep.mubr.f32.mxu0 %v1042
        %1631 = vmatmul.mubr.f32.gmra.mrb[0].mxu0 %v1041
        %v1632 = vpop.f32.mrb[0].mxu0
        %v1633 = vadd.f32 %v1488, %v1632
        %v1634 = vpop.f32.mrb[0].mxu0
        %1635 = vmatprep.mubr.f32.mxu0 %v1051
        %1636 = vmatmul.mubr.f32.gmra.mrb[0].mxu0 %v1050
        %v1637 = vpop.f32.mrb[0].mxu0
        %v1638 = vadd.f32 %v1493, %v1637
        %v1639 = vpop.f32.mrb[0].mxu0
        %1640 = vdwg.mxu0
        %1641 = vmatprep.subr.mxu0 0.0
        %1642 = vmatpush1.msra.mxu0 %v1151
        %1643 = vmatprep.subr.mxu0 0.0
        %1644 = vmatpush1.msra.mxu0 %v1152
        %1645 = vmatprep.subr.mxu0 0.0
        %1646 = vmatpush1.msra.mxu0 %v1153
        %1647 = vmatprep.subr.mxu0 0.0
        %1648 = vmatpush1.msra.mxu0 %v1154
        %1649 = vmatprep.subr.mxu0 0.0
        %1650 = vmatpush1.msra.mxu0 %v1155
        %1651 = vmatprep.subr.mxu0 0.0
        %1652 = vmatpush1.msra.mxu0 %v1156
        %1653 = vmatprep.subr.mxu0 0.0
        %1654 = vmatpush1.msra.mxu0 %v1157
        %1655 = vmatprep.subr.mxu0 0.0
        %1656 = vmatpush1.msra.mxu0 %v1158
        %1657 = vmatprep.subr.mxu0 0.0
        %1658 = vmatpush1.msra.mxu0 %v1159
        %1659 = vmatprep.subr.mxu0 0.0
        %1660 = vmatpush1.msra.mxu0 %v1160
        %1661 = vmatprep.subr.mxu0 0.0
        %1662 = vmatpush1.msra.mxu0 %v1161
        %1663 = vmatprep.subr.mxu0 0.0
        %1664 = vmatpush1.msra.mxu0 %v1162
        %1665 = vmatprep.subr.mxu0 0.0
        %1666 = vmatpush1.msra.mxu0 %v1163
        %1667 = vmatprep.subr.mxu0 0.0
        %1668 = vmatpush1.msra.mxu0 %v1164
        %1669 = vmatprep.subr.mxu0 0.0
        %1670 = vmatpush1.msra.mxu0 %v1165
        %1671 = vmatprep.subr.mxu0 0.0
        %1672 = vmatpush1.msra.mxu0 %v1166
        %1673 = vmatprep.subr.mxu0 0.0
        %1674 = vmatpush1.msra.mxu0 %v1167
        %1675 = vmatprep.subr.mxu0 0.0
        %1676 = vmatpush1.msra.mxu0 %v1168
        %1677 = vmatprep.subr.mxu0 0.0
        %1678 = vmatpush1.msra.mxu0 %v1169
        %1679 = vmatprep.subr.mxu0 0.0
        %1680 = vmatpush1.msra.mxu0 %v1170
        %1681 = vmatprep.subr.mxu0 0.0
        %1682 = vmatpush1.msra.mxu0 %v1171
        %1683 = vmatprep.subr.mxu0 0.0
        %1684 = vmatpush1.msra.mxu0 %v1172
        %1685 = vmatprep.subr.mxu0 0.0
        %1686 = vmatpush1.msra.mxu0 %v1173
        %1687 = vmatprep.subr.mxu0 0.0
        %1688 = vmatpush1.msra.mxu0 %v1174
        %1689 = vmatprep.subr.mxu0 0.0
        %1690 = vmatpush1.msra.mxu0 %v1175
        %1691 = vmatprep.subr.mxu0 0.0
        %1692 = vmatpush1.msra.mxu0 %v1176
        %1693 = vmatprep.subr.mxu0 0.0
        %1694 = vmatpush1.msra.mxu0 %v1177
        %1695 = vmatprep.subr.mxu0 0.0
        %1696 = vmatpush1.msra.mxu0 %v1178
        %1697 = vmatprep.subr.mxu0 0.0
        %1698 = vmatpush1.msra.mxu0 %v1179
        %1699 = vmatprep.subr.mxu0 0.0
        %1700 = vmatpush1.msra.mxu0 %v1180
        %1701 = vmatprep.subr.mxu0 0.0
        %1702 = vmatpush1.msra.mxu0 %v1181
        %1703 = vmatprep.subr.mxu0 0.0
        %1704 = vmatpush1.msra.mxu0 %v1182
        %1705 = vmatprep.mubr.f32.mxu0 %v918
        %1706 = vmatmul.mubr.f32.gmra.mrb[0].mxu0 %v917
        %v1707 = vpop.f32.mrb[0].mxu0
        %v1708 = vadd.f32 %v1563, %v1707
        %v1709 = vpop.f32.mrb[0].mxu0
        %1710 = vmatprep.mubr.f32.mxu0 %v927
        %1711 = vmatmul.mubr.f32.gmra.mrb[0].mxu0 %v926
        %v1712 = vpop.f32.mrb[0].mxu0
        %v1713 = vadd.f32 %v1568, %v1712
        %v1714 = vpop.f32.mrb[0].mxu0
        %1715 = vmatprep.mubr.f32.mxu0 %v936
        %1716 = vmatmul.mubr.f32.gmra.mrb[0].mxu0 %v935
        %v1717 = vpop.f32.mrb[0].mxu0
        %v1718 = vadd.f32 %v1573, %v1717
        %v1719 = vpop.f32.mrb[0].mxu0
        %1720 = vmatprep.mubr.f32.mxu0 %v945
        %1721 = vmatmul.mubr.f32.gmra.mrb[0].mxu0 %v944
        %v1722 = vpop.f32.mrb[0].mxu0
        %v1723 = vadd.f32 %v1578, %v1722
        %v1724 = vpop.f32.mrb[0].mxu0
        %1725 = vmatprep.mubr.f32.mxu0 %v954
        %1726 = vmatmul.mubr.f32.gmra.mrb[0].mxu0 %v953
        %v1727 = vpop.f32.mrb[0].mxu0
        %v1728 = vadd.f32 %v1583, %v1727
        %v1729 = vpop.f32.mrb[0].mxu0
        %1730 = vmatprep.mubr.f32.mxu0 %v963
        %1731 = vmatmul.mubr.f32.gmra.mrb[0].mxu0 %v962
        %v1732 = vpop.f32.mrb[0].mxu0
        %v1733 = vadd.f32 %v1588, %v1732
        %v1734 = vpop.f32.mrb[0].mxu0
        %1735 = vmatprep.mubr.f32.mxu0 %v972
        %1736 = vmatmul.mubr.f32.gmra.mrb[0].mxu0 %v971
        %v1737 = vpop.f32.mrb[0].mxu0
        %v1738 = vadd.f32 %v1593, %v1737
        %v1739 = vpop.f32.mrb[0].mxu0
        %1740 = vmatprep.mubr.f32.mxu0 %v981
        %1741 = vmatmul.mubr.f32.gmra.mrb[0].mxu0 %v980
        %v1742 = vpop.f32.mrb[0].mxu0
        %v1743 = vadd.f32 %v1598, %v1742
        %v1744 = vpop.f32.mrb[0].mxu0
        %1745 = vmatprep.mubr.f32.mxu0 %v990
        %1746 = vmatmul.mubr.f32.gmra.mrb[0].mxu0 %v989
        %v1747 = vpop.f32.mrb[0].mxu0
        %v1748 = vadd.f32 %v1603, %v1747
        %v1749 = vpop.f32.mrb[0].mxu0
        %1750 = vmatprep.mubr.f32.mxu0 %v999
        %1751 = vmatmul.mubr.f32.gmra.mrb[0].mxu0 %v998
        %v1752 = vpop.f32.mrb[0].mxu0
        %v1753 = vadd.f32 %v1608, %v1752
        %v1754 = vpop.f32.mrb[0].mxu0
        %1755 = vmatprep.mubr.f32.mxu0 %v1008
        %1756 = vmatmul.mubr.f32.gmra.mrb[0].mxu0 %v1007
        %v1757 = vpop.f32.mrb[0].mxu0
        %v1758 = vadd.f32 %v1613, %v1757
        %v1759 = vpop.f32.mrb[0].mxu0
        %1760 = vmatprep.mubr.f32.mxu0 %v1017
        %1761 = vmatmul.mubr.f32.gmra.mrb[0].mxu0 %v1016
        %v1762 = vpop.f32.mrb[0].mxu0
        %v1763 = vadd.f32 %v1618, %v1762
        %v1764 = vpop.f32.mrb[0].mxu0
        %1765 = vmatprep.mubr.f32.mxu0 %v1026
        %1766 = vmatmul.mubr.f32.gmra.mrb[0].mxu0 %v1025
        %v1767 = vpop.f32.mrb[0].mxu0
        %v1768 = vadd.f32 %v1623, %v1767
        %v1769 = vpop.f32.mrb[0].mxu0
        %1770 = vmatprep.mubr.f32.mxu0 %v1035
        %1771 = vmatmul.mubr.f32.gmra.mrb[0].mxu0 %v1034
        %v1772 = vpop.f32.mrb[0].mxu0
        %v1773 = vadd.f32 %v1628, %v1772
        %v1774 = vpop.f32.mrb[0].mxu0
        %1775 = vmatprep.mubr.f32.mxu0 %v1044
        %1776 = vmatmul.mubr.f32.gmra.mrb[0].mxu0 %v1043
        %v1777 = vpop.f32.mrb[0].mxu0
        %v1778 = vadd.f32 %v1633, %v1777
        %v1779 = vpop.f32.mrb[0].mxu0
        %1780 = vmatprep.mubr.f32.mxu0 %v1053
        %1781 = vmatmul.mubr.f32.gmra.mrb[0].mxu0 %v1052
        %v1782 = vpop.f32.mrb[0].mxu0
        %v1783 = vadd.f32 %v1638, %v1782
        %v1784 = vpop.f32.mrb[0].mxu0
        %1785 = vdwg.mxu0
        %1786 = vmatprep.subr.mxu0 0.0
        %1787 = vmatpush1.msra.mxu0 %v1183
        %1788 = vmatprep.subr.mxu0 0.0
        %1789 = vmatpush1.msra.mxu0 %v1184
        %1790 = vmatprep.subr.mxu0 0.0
        %1791 = vmatpush1.msra.mxu0 %v1185
        %1792 = vmatprep.subr.mxu0 0.0
        %1793 = vmatpush1.msra.mxu0 %v1186
        %1794 = vmatprep.subr.mxu0 0.0
        %1795 = vmatpush1.msra.mxu0 %v1187
        %1796 = vmatprep.subr.mxu0 0.0
        %1797 = vmatpush1.msra.mxu0 %v1188
        %1798 = vmatprep.subr.mxu0 0.0
        %1799 = vmatpush1.msra.mxu0 %v1189
        %1800 = vmatprep.subr.mxu0 0.0
        %1801 = vmatpush1.msra.mxu0 %v1190
        %1802 = vmatprep.subr.mxu0 0.0
        %1803 = vmatpush1.msra.mxu0 %v1191
        %1804 = vmatprep.subr.mxu0 0.0
        %1805 = vmatpush1.msra.mxu0 %v1192
        %1806 = vmatprep.subr.mxu0 0.0
        %1807 = vmatpush1.msra.mxu0 %v1193
        %1808 = vmatprep.subr.mxu0 0.0
        %1809 = vmatpush1.msra.mxu0 %v1194
        %1810 = vmatprep.subr.mxu0 0.0
        %1811 = vmatpush1.msra.mxu0 %v1195
        %1812 = vmatprep.subr.mxu0 0.0
        %1813 = vmatpush1.msra.mxu0 %v1196
        %1814 = vmatprep.subr.mxu0 0.0
        %1815 = vmatpush1.msra.mxu0 %v1197
        %1816 = vmatprep.subr.mxu0 0.0
        %1817 = vmatpush1.msra.mxu0 %v1198
        %1818 = vmatprep.subr.mxu0 0.0
        %1819 = vmatpush1.msra.mxu0 0.0
        %1820 = vmatprep.subr.mxu0 0.0
        %1821 = vmatpush1.msra.mxu0 0.0
        %1822 = vmatprep.subr.mxu0 0.0
        %1823 = vmatpush1.msra.mxu0 0.0
        %1824 = vmatprep.subr.mxu0 0.0
        %1825 = vmatpush1.msra.mxu0 0.0
        %1826 = vmatprep.subr.mxu0 0.0
        %1827 = vmatpush1.msra.mxu0 0.0
        %1828 = vmatprep.subr.mxu0 0.0
        %1829 = vmatpush1.msra.mxu0 0.0
        %1830 = vmatprep.subr.mxu0 0.0
        %1831 = vmatpush1.msra.mxu0 0.0
        %1832 = vmatprep.subr.mxu0 0.0
        %1833 = vmatpush1.msra.mxu0 0.0
        %1834 = vmatprep.subr.mxu0 0.0
        %1835 = vmatpush1.msra.mxu0 0.0
        %1836 = vmatprep.subr.mxu0 0.0
        %1837 = vmatpush1.msra.mxu0 0.0
        %1838 = vmatprep.subr.mxu0 0.0
        %1839 = vmatpush1.msra.mxu0 0.0
        %1840 = vmatprep.subr.mxu0 0.0
        %1841 = vmatpush1.msra.mxu0 0.0
        %1842 = vmatprep.subr.mxu0 0.0
        %1843 = vmatpush1.msra.mxu0 0.0
        %1844 = vmatprep.subr.mxu0 0.0
        %1845 = vmatpush1.msra.mxu0 0.0
        %1846 = vmatprep.subr.mxu0 0.0
        %1847 = vmatpush1.msra.mxu0 0.0
        %1848 = vmatprep.subr.mxu0 0.0
        %1849 = vmatpush1.msra.mxu0 0.0
        %1850 = vmatprep.mubr.f32.mxu0 0.0
        %1851 = vmatmul.mubr.f32.gmra.mrb[0].mxu0 %v919
        %v1852 = vpop.f32.mrb[0].mxu0
        %v1853 = vadd.f32 %v1708, %v1852
        %v1854 = vpop.f32.mrb[0].mxu0
        %1855 = vmatprep.mubr.f32.mxu0 0.0
        %1856 = vmatmul.mubr.f32.gmra.mrb[0].mxu0 %v928
        %v1857 = vpop.f32.mrb[0].mxu0
        %v1858 = vadd.f32 %v1713, %v1857
        %v1859 = vpop.f32.mrb[0].mxu0
        %1860 = vmatprep.mubr.f32.mxu0 0.0
        %1861 = vmatmul.mubr.f32.gmra.mrb[0].mxu0 %v937
        %v1862 = vpop.f32.mrb[0].mxu0
        %v1863 = vadd.f32 %v1718, %v1862
        %v1864 = vpop.f32.mrb[0].mxu0
        %1865 = vmatprep.mubr.f32.mxu0 0.0
        %1866 = vmatmul.mubr.f32.gmra.mrb[0].mxu0 %v946
        %v1867 = vpop.f32.mrb[0].mxu0
        %v1868 = vadd.f32 %v1723, %v1867
        %v1869 = vpop.f32.mrb[0].mxu0
        %1870 = vmatprep.mubr.f32.mxu0 0.0
        %1871 = vmatmul.mubr.f32.gmra.mrb[0].mxu0 %v955
        %v1872 = vpop.f32.mrb[0].mxu0
        %v1873 = vadd.f32 %v1728, %v1872
        %v1874 = vpop.f32.mrb[0].mxu0
        %1875 = vmatprep.mubr.f32.mxu0 0.0
        %1876 = vmatmul.mubr.f32.gmra.mrb[0].mxu0 %v964
        %v1877 = vpop.f32.mrb[0].mxu0
        %v1878 = vadd.f32 %v1733, %v1877
        %v1879 = vpop.f32.mrb[0].mxu0
        %1880 = vmatprep.mubr.f32.mxu0 0.0
        %1881 = vmatmul.mubr.f32.gmra.mrb[0].mxu0 %v973
        %v1882 = vpop.f32.mrb[0].mxu0
        %v1883 = vadd.f32 %v1738, %v1882
        %v1884 = vpop.f32.mrb[0].mxu0
        %1885 = vmatprep.mubr.f32.mxu0 0.0
        %1886 = vmatmul.mubr.f32.gmra.mrb[0].mxu0 %v982
        %v1887 = vpop.f32.mrb[0].mxu0
        %v1888 = vadd.f32 %v1743, %v1887
        %v1889 = vpop.f32.mrb[0].mxu0
        %1890 = vmatprep.mubr.f32.mxu0 0.0
        %1891 = vmatmul.mubr.f32.gmra.mrb[0].mxu0 %v991
        %v1892 = vpop.f32.mrb[0].mxu0
        %v1893 = vadd.f32 %v1748, %v1892
        %v1894 = vpop.f32.mrb[0].mxu0
        %1895 = vmatprep.mubr.f32.mxu0 0.0
        %1896 = vmatmul.mubr.f32.gmra.mrb[0].mxu0 %v1000
        %v1897 = vpop.f32.mrb[0].mxu0
        %v1898 = vadd.f32 %v1753, %v1897
        %v1899 = vpop.f32.mrb[0].mxu0
        %1900 = vmatprep.mubr.f32.mxu0 0.0
        %1901 = vmatmul.mubr.f32.gmra.mrb[0].mxu0 %v1009
        %v1902 = vpop.f32.mrb[0].mxu0
        %v1903 = vadd.f32 %v1758, %v1902
        %v1904 = vpop.f32.mrb[0].mxu0
        %1905 = vmatprep.mubr.f32.mxu0 0.0
        %1906 = vmatmul.mubr.f32.gmra.mrb[0].mxu0 %v1018
        %v1907 = vpop.f32.mrb[0].mxu0
        %v1908 = vadd.f32 %v1763, %v1907
        %v1909 = vpop.f32.mrb[0].mxu0
        %1910 = vmatprep.mubr.f32.mxu0 0.0
        %1911 = vmatmul.mubr.f32.gmra.mrb[0].mxu0 %v1027
        %v1912 = vpop.f32.mrb[0].mxu0
        %v1913 = vadd.f32 %v1768, %v1912
        %v1914 = vpop.f32.mrb[0].mxu0
        %1915 = vmatprep.mubr.f32.mxu0 0.0
        %1916 = vmatmul.mubr.f32.gmra.mrb[0].mxu0 %v1036
        %v1917 = vpop.f32.mrb[0].mxu0
        %v1918 = vadd.f32 %v1773, %v1917
        %v1919 = vpop.f32.mrb[0].mxu0
        %1920 = vmatprep.mubr.f32.mxu0 0.0
        %1921 = vmatmul.mubr.f32.gmra.mrb[0].mxu0 %v1045
        %v1922 = vpop.f32.mrb[0].mxu0
        %v1923 = vadd.f32 %v1778, %v1922
        %v1924 = vpop.f32.mrb[0].mxu0
        %1925 = vmatprep.mubr.f32.mxu0 0.0
        %1926 = vmatmul.mubr.f32.gmra.mrb[0].mxu0 %v1054
        %v1927 = vpop.f32.mrb[0].mxu0
        %v1928 = vadd.f32 %v1783, %v1927
        %v1929 = vpop.f32.mrb[0].mxu0
        %1930 = vdwg.mxu0
        %1931 = vst [vmem:[%s248] sm:$0xff] %v1853
        %1932 = vst [vmem:[%s248 + $0x8] sm:$0xff] %v1858
        %1933 = vst [vmem:[%s248 + $0x10] sm:$0xff] %v1863
        %1934 = vst [vmem:[%s248 + $0x18] sm:$0xff] %v1868
        %1935 = vst [vmem:[%s248 + $0x20] sm:$0xff] %v1873
        %1936 = vst [vmem:[%s248 + $0x28] sm:$0xff] %v1878
        %1937 = vst [vmem:[%s248 + $0x30] sm:$0xff] %v1883
        %1938 = vst [vmem:[%s248 + $0x38] sm:$0xff] %v1888
        %1939 = vst [vmem:[%s248 + $0x40] sm:$0xff] %v1893
        %1940 = vst [vmem:[%s248 + $0x48] sm:$0xff] %v1898
        %1941 = vst [vmem:[%s248 + $0x50] sm:$0xff] %v1903
        %1942 = vst [vmem:[%s248 + $0x58] sm:$0xff] %v1908
        %1943 = vst [vmem:[%s248 + $0x60] sm:$0xff] %v1913
        %1944 = vst [vmem:[%s248 + $0x68] sm:$0xff] %v1918
        %1945 = vst [vmem:[%s248 + $0x70] sm:$0xff] %v1923
        %1946 = vst [vmem:[%s248 + $0x78] sm:$0xff] %v1928
        // Predicated region
        $region119: #{tpu_custom_call.1} parent=35 // pred_check
          %p1947 = pneg %p276
        $region120: #{tpu_custom_call.1} parent=35 // pred_check_branch
          %1949 = sbr.rel (%p1947) target = $region122
        $region121: #{tpu_custom_call.1} parent=35 // pred_region
          %1950 = vst [vmem:[%s255] sm:$0xff] 0.0
          %1951 = vst [vmem:[%s262] sm:$0xff] 0.0
        $region122: #{tpu_custom_call.1} parent=35 // pred_fallthru
          _
        %v1952 = vld [vmem:[%s255] sm:$0xff]
        %v1953 = vadd.f32 %v1853, %v1858
        %v1954 = vadd.f32 %v1953, %v1863
        %v1955 = vadd.f32 %v1954, %v1868
        %v1956 = vadd.f32 %v1955, %v1873
        %v1957 = vadd.f32 %v1956, %v1878
        %v1958 = vadd.f32 %v1957, %v1883
        %v1959 = vadd.f32 %v1958, %v1888
        %v1960 = vadd.f32 %v1959, %v1893
        %v1961 = vadd.f32 %v1960, %v1898
        %v1962 = vadd.f32 %v1961, %v1903
        %v1963 = vadd.f32 %v1962, %v1908
        %v1964 = vadd.f32 %v1963, %v1913
        %v1965 = vadd.f32 %v1964, %v1918
        %v1966 = vadd.f32 %v1965, %v1923
        %v1967 = vadd.f32 %v1966, %v1928
        %v1968 = vadd.f32 %v1952, %v1967
        %1969 = vst [vmem:[%s255] sm:$0xff] %v1968
        %v1970 = vld [vmem:[%s262] sm:$0xff]
        %v1971 = vmul.f32 %v1853, %v1853
        %v1972 = vmul.f32 %v1858, %v1858
        %v1973 = vmul.f32 %v1863, %v1863
        %v1974 = vmul.f32 %v1868, %v1868
        %v1975 = vmul.f32 %v1873, %v1873
        %v1976 = vmul.f32 %v1878, %v1878
        %v1977 = vmul.f32 %v1883, %v1883
        %v1978 = vmul.f32 %v1888, %v1888
        %v1979 = vmul.f32 %v1893, %v1893
        %v1980 = vmul.f32 %v1898, %v1898
        %v1981 = vmul.f32 %v1903, %v1903
        %v1982 = vmul.f32 %v1908, %v1908
        %v1983 = vmul.f32 %v1913, %v1913
        %v1984 = vmul.f32 %v1918, %v1918
        %v1985 = vmul.f32 %v1923, %v1923
        %v1986 = vmul.f32 %v1928, %v1928
        %v1987 = vadd.f32 %v1971, %v1972
        %v1988 = vadd.f32 %v1987, %v1973
        %v1989 = vadd.f32 %v1988, %v1974
        %v1990 = vadd.f32 %v1989, %v1975
        %v1991 = vadd.f32 %v1990, %v1976
        %v1992 = vadd.f32 %v1991, %v1977
        %v1993 = vadd.f32 %v1992, %v1978
        %v1994 = vadd.f32 %v1993, %v1979
        %v1995 = vadd.f32 %v1994, %v1980
        %v1996 = vadd.f32 %v1995, %v1981
        %v1997 = vadd.f32 %v1996, %v1982
        %v1998 = vadd.f32 %v1997, %v1983
        %v1999 = vadd.f32 %v1998, %v1984
        %v2000 = vadd.f32 %v1999, %v1985
        %v2001 = vadd.f32 %v2000, %v1986
        %v2002 = vadd.f32 %v1970, %v2001
        %2003 = vst [vmem:[%s262] sm:$0xff] %v2002
        %s2004 = sand.u32 %s131, 1
        %s2005 = scalar_lea.sflag [#allocation6], %s2004
        %s2006 = sand.u32 %s131, 1
        %s2007 = smul.addr %s2006, 128
        %s2008 = scalar_lea.vmem [#allocation5], %s2007
        %s2009 = sand.u32 %s25, 1
        %s2010 = scalar_lea.sflag [#allocation8], %s2009
        %s2011 = sand.u32 %s157, 1
        %s2012 = smul.addr %s2011, 8
        %s2013 = scalar_lea.vmem [#allocation7], %s2012
        %s2014 = sand.u32 %s25, 1
        %s2015 = scalar_lea.sflag [#allocation8], %s2014
        %s2016 = sand.u32 %s183, 1
        %s2017 = smul.addr %s2016, 8
        %s2018 = scalar_lea.vmem [#allocation9], %s2017
        // Predicated region
        $region123: #{tpu_custom_call.1} parent=35 // pred_check
          %p2019 = pneg %p141
        $region124: #{tpu_custom_call.1} parent=35 // pred_check_branch
          %2021 = sbr.rel (%p2019) target = $region126
        $region125: #{tpu_custom_call.1} parent=35 // pred_region
          %s2022 = smul.u32 8, %s30
          %s2024 = ssub.s32 2048, 2048
          %2025 = vsyncadd %s2005, %s2024
          %s2026 = smul.addr %s2022, 2
          %s2027 = smul.addr %s29, 32
          %s2028 = sadd.s32 %s2026, %s2027
          %s2029 = smul.addr %s2028, 128
          %s2030 = scalar_lea.hbm %s5, %s2029
          %s2031 = sshll.u32 %s2008, 4
          %s2032 = int_to_ptr.vmem [resolvable:$true] %s2031
          %2037 = dma.vmem_to_hbm [thread:$0]  %s2032, 2048, %s2030, %s2005, 128, 128, 8
        $region126: #{tpu_custom_call.1} parent=35 // pred_fallthru
          _
        // Predicated region
        $region127: #{tpu_custom_call.1} parent=35 // pred_check
          %p2038 = pneg %p167
        $region128: #{tpu_custom_call.1} parent=35 // pred_check_branch
          %2040 = sbr.rel (%p2038) target = $region130
        $region129: #{tpu_custom_call.1} parent=35 // pred_region
          %s2042 = ssub.s32 128, 128
          %2043 = vsyncadd %s2010, %s2042
          %s2044 = smul.addr %s29, 128
          %s2045 = scalar_lea.hbm %s6, %s2044
          %s2047 = sshll.u32 %s2013, 4
          %s2048 = int_to_ptr.vmem [resolvable:$true] %s2047
          %2050 = dma.vmem_to_hbm [thread:$0]  %s2048, 128, %s2045, %s2010
        $region130: #{tpu_custom_call.1} parent=35 // pred_fallthru
          _
        // Predicated region
        $region131: #{tpu_custom_call.1} parent=35 // pred_check
          %p2051 = pneg %p193
        $region132: #{tpu_custom_call.1} parent=35 // pred_check_branch
          %2053 = sbr.rel (%p2051) target = $region134
        $region133: #{tpu_custom_call.1} parent=35 // pred_region
          %s2055 = ssub.s32 128, 128
          %2056 = vsyncadd %s2015, %s2055
          %s2057 = smul.addr %s29, 128
          %s2058 = scalar_lea.hbm %s7, %s2057
          %s2060 = sshll.u32 %s2018, 4
          %s2061 = int_to_ptr.vmem [resolvable:$true] %s2060
          %2063 = dma.vmem_to_hbm [thread:$0]  %s2061, 128, %s2058, %s2015
        $region134: #{tpu_custom_call.1} parent=35 // pred_fallthru
          _
      $region36: #{tpu_custom_call.1} parent=5 // pred_fallthru
        _
      %p2064 = scmp.le.s32.totalorder 2, %s20
      // Predicated region
      $region135: #{tpu_custom_call.1} parent=5 // pred_check
        %p2065 = pneg %p2064
      $region136: #{tpu_custom_call.1} parent=5 // pred_check_branch
        %2067 = sbr.rel (%p2065) target = $region138
      $region137: #{tpu_custom_call.1} parent=5 // pred_region
        %s2068 = ssub.s32 %s20, 2
        // Predicated region
        $region139: #{tpu_custom_call.1} parent=137 // pred_check
          %p2069 = pneg %p147
        $region140: #{tpu_custom_call.1} parent=137 // pred_check_branch
          %2071 = sbr.rel (%p2069) target = $region142
        $region141: #{tpu_custom_call.1} parent=137 // pred_region
          %s2072 = sand.u32 %s132, 1
          %s2073 = scalar_lea.sflag [#allocation6], %s2072
          %s2074 = sand.u32 %s132, 1
          %s2075 = smul.addr %s2074, 128
          %s2076 = scalar_lea.vmem [#allocation5], %s2075
          %2077 = dma.done %s2073, 2048
        $region142: #{tpu_custom_call.1} parent=137 // pred_fallthru
          _
        // Predicated region
        $region143: #{tpu_custom_call.1} parent=137 // pred_check
          %p2078 = pneg %p173
        $region144: #{tpu_custom_call.1} parent=137 // pred_check_branch
          %2080 = sbr.rel (%p2078) target = $region146
        $region145: #{tpu_custom_call.1} parent=137 // pred_region
          %s2081 = sand.u32 %s26, 1
          %s2082 = scalar_lea.sflag [#allocation8], %s2081
          %s2083 = sand.u32 %s158, 1
          %s2084 = smul.addr %s2083, 8
          %s2085 = scalar_lea.vmem [#allocation7], %s2084
          %2086 = dma.done %s2082, 128
        $region146: #{tpu_custom_call.1} parent=137 // pred_fallthru
          _
        // Predicated region
        $region147: #{tpu_custom_call.1} parent=137 // pred_check
          %p2087 = pneg %p199
        $region148: #{tpu_custom_call.1} parent=137 // pred_check_branch
          %2089 = sbr.rel (%p2087) target = $region150
        $region149: #{tpu_custom_call.1} parent=137 // pred_region
          %s2090 = sand.u32 %s26, 1
          %s2091 = scalar_lea.sflag [#allocation8], %s2090
          %s2092 = sand.u32 %s184, 1
          %s2093 = smul.addr %s2092, 8
          %s2094 = scalar_lea.vmem [#allocation9], %s2093
          %2095 = dma.done %s2091, 128
        $region150: #{tpu_custom_call.1} parent=137 // pred_fallthru
          _
      $region138: #{tpu_custom_call.1} parent=5 // pred_fallthru
        _
    $region6: #{tpu_custom_call.1} parent=1 // loop_footer
      %s24 = sadd.s32 1, %s20
    $region7: #{tpu_custom_call.1} parent=1 // loop_footer_branch
      %19 = sbr.rel target = $region3
    $region8: #{tpu_custom_call.1} parent=1 // loop_exit
      _
    %2096 = vsyncpa [#allocation6], 1
    %s2097 = scalar_lea.sflag [#allocation6], 1
    %2098 = vsyncpa %s2097, 1
    %2099 = vsyncpa [#allocation8], 1
    %s2100 = scalar_lea.sflag [#allocation8], 1
    %2101 = vsyncpa %s2100, 1
  %2102 = vsyncmov [#allocation4]
  %s2103 = vpop.sfrf %2102
  %p2104 = scmp.eq.s32.totalorder %s2103, 0
  %p2105 = pneg %p2104
  %2107 = shalt.err (%p2105)
  %s2108 = scalar_lea.sflag [#allocation4], 1
  %2109 = vsyncmov %s2108
  %s2110 = vpop.sfrf %2109
  %p2111 = scmp.eq.s32.totalorder %s2110, 0
  %p2112 = pneg %p2111
  %2114 = shalt.err (%p2112)

</llo_original>
